<compile_context>
chip_gen: v6e
topology: v6e:2x2x1
jax: 0.10.0
libtpu: 0.0.40
codegen_flags: <defaults>
</compile_context>

<pallas_src>
import functools

import jax
import jax.numpy as jnp
from jax import lax
from jax.experimental import pallas as pl
from jax.experimental.pallas import tpu as pltpu

EPS = 1e-5  # nn.BatchNorm2d default eps


def _round_up(v, m):
    return (v + m - 1) // m * m


# ------------------------------ Pallas kernels ------------------------------ #

def _conv1_kernel(x_ref, w1_ref, c1_ref, st1_ref, *, s, Ho, Wo):
    """Pass 1: raw 3x3/stride-s conv1 for ONE image + bn1 partial stats.

    x_ref  : (s*s, Hq, Wq8, Cin_p) f32  parity-split, spatially padded image
    w1_ref : (9*Cin_p, Cp)         bf16 per-tap weights stacked along K
    c1_ref : (1, Ho, Wo, Cp)       f32  raw conv1 output (pre-BN)
    st1_ref: (1, 2, Cp)            f32  [sum, sum-of-squares] over this image
    """
    Cin_p = x_ref.shape[-1]
    Cp = c1_ref.shape[-1]
    M = Ho * Wo

    taps = []
    for di in range(3):
        for dj in range(3):
            g = (di % s) * s + (dj % s)          # parity sub-grid
            r0, c0 = di // s, dj // s            # contiguous static offsets
            t = x_ref[g, r0:r0 + Ho, c0:c0 + Wo, :].reshape(M, Cin_p)
            taps.append(t.astype(jnp.bfloat16))  # bf16 MXU operand
    # Single large-K matmul (K = 9*Cin_p): the MXU accumulates over K, no
    # per-tap pop + VPU add.  f32 accumulation.
    patch = jnp.concatenate(taps, axis=1)        # lane-aligned (128-multiple) concat
    c1 = jnp.dot(patch, w1_ref[...], preferred_element_type=jnp.float32)

    c1_ref[0] = c1.reshape(Ho, Wo, Cp)
    st1_ref[0] = jnp.concatenate(
        [jnp.sum(c1, axis=0, keepdims=True),
         jnp.sum(c1 * c1, axis=0, keepdims=True)], axis=0)


def _conv2_kernel(*refs, Ho, Wo, Wp8, sc_conv):
    """Pass 2: bn1 (folded) + relu -> raw 3x3 conv2 [+ raw 1x1 shortcut] + stats."""
    if sc_conv:
        (c1_ref, s1_ref, t1_ref, w2_ref, xc_ref, wsc_ref,
         c2_ref, st2_ref, sc_ref, stsc_ref, y1p_ref) = refs
    else:
        (c1_ref, s1_ref, t1_ref, w2_ref,
         c2_ref, st2_ref, y1p_ref) = refs
        xc_ref = wsc_ref = sc_ref = stsc_ref = None

    Cp = c1_ref.shape[-1]
    M = Ho * Wo
    f32, bf16 = jnp.float32, jnp.bfloat16

    # bn1 as one fused multiply-add (scale/shift folded in the wrapper), relu, f32.
    y1 = jnp.maximum(c1_ref[0].reshape(M, Cp) * s1_ref[...] + t1_ref[...], 0.0)

    # conv2 input scratch (bf16): zero ONLY the 1-px halo.  The interior row
    # slab is stored full-width and sublane-aligned (col 0 and cols > Wo zero),
    # so no buffer region is written twice and no store is masked.
    zplane = jnp.zeros((1, Wp8, Cp), bf16)
    y1p_ref[0:1, :, :] = zplane
    y1p_ref[Ho + 1:Ho + 2, :, :] = zplane
    mid = jnp.concatenate(
        [jnp.zeros((Ho, 1, Cp), f32),
         y1.reshape(Ho, Wo, Cp),
         jnp.zeros((Ho, Wp8 - Wo - 1, Cp), f32)], axis=1)
    y1p_ref[1:Ho + 1, :, :] = mid.astype(bf16)

    # conv2 (stride 1) as one large-K matmul from the VMEM-resident bf16 scratch.
    taps = [y1p_ref[di:di + Ho, dj:dj + Wo, :].reshape(M, Cp)
            for di in range(3) for dj in range(3)]
    c2 = jnp.dot(jnp.concatenate(taps, axis=1), w2_ref[...],
                 preferred_element_type=f32)
    c2_ref[0] = c2.reshape(Ho, Wo, Cp)
    st2_ref[0] = jnp.concatenate(
        [jnp.sum(c2, axis=0, keepdims=True),
         jnp.sum(c2 * c2, axis=0, keepdims=True)], axis=0)

    if sc_conv:
        Cin_p = xc_ref.shape[-1]
        xc = xc_ref[0].reshape(M, Cin_p).astype(bf16)
        sc = jnp.dot(xc, wsc_ref[...], preferred_element_type=f32)
        sc_ref[0] = sc.reshape(Ho, Wo, Cp)
        stsc_ref[0] = jnp.concatenate(
            [jnp.sum(sc, axis=0, keepdims=True),
             jnp.sum(sc * sc, axis=0, keepdims=True)], axis=0)


def _final_kernel(*refs, Ho, Wo, sc_conv):
    """Pass 3: bn2 [+ bn_sc] (folded) + residual add + relu."""
    if sc_conv:
        c2_ref, sc_ref, s2_ref, t2_ref, ss_ref, ts_ref, o_ref = refs
    else:
        c2_ref, sc_ref, s2_ref, t2_ref, o_ref = refs
        ss_ref = ts_ref = None
    Cp = c2_ref.shape[-1]
    M = Ho * Wo

    y2 = c2_ref[0].reshape(M, Cp) * s2_ref[...] + t2_ref[...]
    if sc_conv:
        sc = sc_ref[0].reshape(M, Cp) * ss_ref[...] + ts_ref[...]
    else:
        sc = sc_ref[0].reshape(M, Cp)   # identity shortcut (Cin_p == Cp), no eye matmul
    o_ref[0] = jnp.maximum(y2 + sc, 0.0).reshape(Ho, Wo, Cp)


# -------------------------------- JAX glue ---------------------------------- #

def _fold_bn(partial_stats, m, gamma, beta):
    """Fold global batch stats into per-channel (scale, shift).

    partial_stats: (n_tiles, 2, Cp) per-tile [sum, sumsq].
    NOTE: single-pass E[x^2]-E[x]^2 variance in f32 (clamped at 0); adequate at
    these activation magnitudes (see review correctness note)."""
    tot = jnp.sum(partial_stats, axis=0)
    mu = tot[0] / m
    var = jnp.maximum(tot[1] / m - mu * mu, 0.0)
    scale = gamma * lax.rsqrt(var + EPS)
    shift = beta - mu * scale
    return scale[None, :], shift[None, :]


def init_basic_block_params(key, in_planes, planes, stride):
    """Deterministic synthetic params matching BasicBlock.__init__ shapes."""
    ks = jax.random.split(key, 9)
    p = {
        "w1": 0.1 * jax.random.normal(ks[0], (planes, in_planes, 3, 3), jnp.float32),
        "g1": 1.0 + 0.1 * jax.random.normal(ks[1], (planes,), jnp.float32),
        "b1": 0.1 * jax.random.normal(ks[2], (planes,), jnp.float32),
        "w2": 0.1 * jax.random.normal(ks[3], (planes, planes, 3, 3), jnp.float32),
        "g2": 1.0 + 0.1 * jax.random.normal(ks[4], (planes,), jnp.float32),
        "b2": 0.1 * jax.random.normal(ks[5], (planes,), jnp.float32),
    }
    if stride != 1 or in_planes != planes:
        p["wsc"] = 0.1 * jax.random.normal(ks[6], (planes, in_planes, 1, 1), jnp.float32)
        p["gsc"] = 1.0 + 0.1 * jax.random.normal(ks[7], (planes,), jnp.float32)
        p["bsc"] = 0.1 * jax.random.normal(ks[8], (planes,), jnp.float32)
    return p


def basic_block_forward(x_nchw, params, in_planes, planes, stride):
    x = jnp.transpose(x_nchw, (0, 2, 3, 1)).astype(jnp.float32)   # NCHW -> NHWC
    N, H, W, _ = x.shape
    s = int(stride)
    Ho = (H - 1) // s + 1
    Wo = (W - 1) // s + 1
    M = N * Ho * Wo
    G = s * s
    Cin_p = _round_up(in_planes, 128)      # lane-dense / MXU-aligned channels
    Cp = _round_up(planes, 128)
    has_sc = (s != 1) or (in_planes != planes)
    f32, bf16 = jnp.float32, jnp.bfloat16

    # --- input prep: halo pad + (stride>1) space-to-depth via ONE reshape/transpose ---
    xp = jnp.pad(x, ((0, 0), (1, 1), (1, 1), (0, Cin_p - in_planes)))
    if s == 1:
        Hq, Wq = H + 2, W + 2
        xq = xp.reshape(N * G, Hq, Wq, Cin_p)
    else:
        Hp, Wp = _round_up(H + 2, s), _round_up(W + 2, s)
        xp = jnp.pad(xp, ((0, 0), (0, Hp - (H + 2)), (0, Wp - (W + 2)), (0, 0)))
        Hq, Wq = Hp // s, Wp // s
        xq = xp.reshape(N, Hq, s, Wq, s, Cin_p).transpose(0, 2, 4, 1, 3, 5)
        xq = xq.reshape(N * G, Hq, Wq, Cin_p)
    Wq8 = _round_up(Wq, 8)                 # sublane-aligned W
    if Wq8 != Wq:
        xq = jnp.pad(xq, ((0, 0), (0, 0), (0, Wq8 - Wq), (0, 0)))

    # centre tap of the input (== x[::s, ::s]); feeds the shortcut path.
    xc = jnp.pad(x[:, ::s, ::s, :],
                 ((0, 0), (0, 0), (0, 0), (0, Cin_p - in_planes)))

    # --- params: bf16 conv weights (MXU), f32 BN affine ---
    def conv3x3_w(w_oihw, cin, cin_p):
        w = jnp.transpose(w_oihw, (2, 3, 1, 0)).reshape(9, cin, planes)
        w = jnp.pad(w, ((0, 0), (0, cin_p - cin), (0, Cp - planes)))
        return w.reshape(9 * cin_p, Cp).astype(bf16)

    def vec(v):
        return jnp.pad(v, (0, Cp - planes))

    w1 = conv3x3_w(params["w1"], in_planes, Cin_p)
    w2 = conv3x3_w(params["w2"], planes, Cp)
    g1, b1 = vec(params["g1"]), vec(params["b1"])
    g2, b2 = vec(params["g2"]), vec(params["b2"])
    if has_sc:
        wsc = jnp.transpose(params["wsc"], (2, 3, 1, 0)).reshape(in_planes, planes)
        wsc = jnp.pad(wsc, ((0, Cin_p - in_planes), (0, Cp - planes))).astype(bf16)
        gsc, bsc = vec(params["gsc"]), vec(params["bsc"])

    cparams = pltpu.CompilerParams(
        dimension_semantics=("parallel",),        # images independent -> both v7x TCs
        vmem_limit_bytes=48 * 1024 * 1024)        # explicit, v7x-safe (< 64 MiB)

    # ---------------- pass 1: conv1 raw + per-image bn1 partial stats ---------------
    c1_raw, st1 = pl.pallas_call(
        functools.partial(_conv1_kernel, s=s, Ho=Ho, Wo=Wo),
        grid=(N,),
        in_specs=[pl.BlockSpec((G, Hq, Wq8, Cin_p), lambda i: (i, 0, 0, 0)),
                  pl.BlockSpec((9 * Cin_p, Cp), lambda i: (0, 0))],
        out_specs=[pl.BlockSpec((1, Ho, Wo, Cp), lambda i: (i, 0, 0, 0)),
                   pl.BlockSpec((1, 2, Cp), lambda i: (i, 0, 0))],
        out_shape=[jax.ShapeDtypeStruct((N, Ho, Wo, Cp), f32),
                   jax.ShapeDtypeStruct((N, 2, Cp), f32)],
        cost_estimate=pl.CostEstimate(
            flops=2 * M * 9 * Cin_p * Cp, transcendentals=0,
            bytes_accessed=int(xq.size) * 4 + int(w1.size) * 2 + M * Cp * 4),
        compiler_params=cparams,
    )(xq, w1)

    scale1, shift1 = _fold_bn(st1, M, g1, b1)     # tiny (Cp-sized) XLA glue

    # -------- pass 2: bn1+relu -> conv2 raw (+ shortcut conv raw) + partial stats ---
    Wp8 = _round_up(Wo + 2, 8)
    in2 = [c1_raw, scale1, shift1, w2]
    in2_specs = [pl.BlockSpec((1, Ho, Wo, Cp), lambda i: (i, 0, 0, 0)),
                 pl.BlockSpec((1, Cp), lambda i: (0, 0)),
                 pl.BlockSpec((1, Cp), lambda i: (0, 0)),
                 pl.BlockSpec((9 * Cp, Cp), lambda i: (0, 0))]
    out2_shape = [jax.ShapeDtypeStruct((N, Ho, Wo, Cp), f32),
                  jax.ShapeDtypeStruct((N, 2, Cp), f32)]
    out2_specs = [pl.BlockSpec((1, Ho, Wo, Cp), lambda i: (i, 0, 0, 0)),
                  pl.BlockSpec((1, 2, Cp), lambda i: (i, 0, 0))]
    if has_sc:
        in2 += [xc, wsc]
        in2_specs += [pl.BlockSpec((1, Ho, Wo, Cin_p), lambda i: (i, 0, 0, 0)),
                      pl.BlockSpec((Cin_p, Cp), lambda i: (0, 0))]
        out2_shape += [jax.ShapeDtypeStruct((N, Ho, Wo, Cp), f32),
                       jax.ShapeDtypeStruct((N, 2, Cp), f32)]
        out2_specs += [pl.BlockSpec((1, Ho, Wo, Cp), lambda i: (i, 0, 0, 0)),
                       pl.BlockSpec((1, 2, Cp), lambda i: (i, 0, 0))]
    res2 = pl.pallas_call(
        functools.partial(_conv2_kernel, Ho=Ho, Wo=Wo, Wp8=Wp8, sc_conv=has_sc),
        grid=(N,),
        in_specs=in2_specs, out_specs=out2_specs, out_shape=out2_shape,
        scratch_shapes=[pltpu.VMEM((Ho + 2, Wp8, Cp), bf16)],   # bf16 conv2 input (v7x VMEM)
        cost_estimate=pl.CostEstimate(
            flops=2 * M * Cp * (9 * Cp + (Cin_p if has_sc else 0)),
            transcendentals=0,
            bytes_accessed=(2 + (2 if has_sc else 0)) * M * Cp * 4 + int(w2.size) * 2),
        compiler_params=cparams,
    )(*in2)
    if has_sc:
        c2_raw, st2, sc_raw, stsc = res2
    else:
        c2_raw, st2 = res2

    scale2, shift2 = _fold_bn(st2, M, g2, b2)

    # ---------------- pass 3: bn2 (+ bn_sc) + residual add + relu -------------------
    if has_sc:
        scalesc, shiftsc = _fold_bn(stsc, M, gsc, bsc)
        in3 = [c2_raw, sc_raw, scale2, shift2, scalesc, shiftsc]
        in3_specs = [pl.BlockSpec((1, Ho, Wo, Cp), lambda i: (i, 0, 0, 0)),
                     pl.BlockSpec((1, Ho, Wo, Cp), lambda i: (i, 0, 0, 0)),
                     pl.BlockSpec((1, Cp), lambda i: (0, 0)),
                     pl.BlockSpec((1, Cp), lambda i: (0, 0)),
                     pl.BlockSpec((1, Cp), lambda i: (0, 0)),
                     pl.BlockSpec((1, Cp), lambda i: (0, 0))]
    else:
        in3 = [c2_raw, xc, scale2, shift2]
        in3_specs = [pl.BlockSpec((1, Ho, Wo, Cp), lambda i: (i, 0, 0, 0)),
                     pl.BlockSpec((1, Ho, Wo, Cp), lambda i: (i, 0, 0, 0)),
                     pl.BlockSpec((1, Cp), lambda i: (0, 0)),
                     pl.BlockSpec((1, Cp), lambda i: (0, 0))]
    out = pl.pallas_call(
        functools.partial(_final_kernel, Ho=Ho, Wo=Wo, sc_conv=has_sc),
        grid=(N,),
        in_specs=in3_specs,
        out_specs=pl.BlockSpec((1, Ho, Wo, Cp), lambda i: (i, 0, 0, 0)),
        out_shape=jax.ShapeDtypeStruct((N, Ho, Wo, Cp), f32),
        compiler_params=cparams,
    )(*in3)

    out = out[..., :planes]                       # drop channel padding (lane-dense store kept)
    return jnp.transpose(out, (0, 3, 1, 2))       # NHWC -> NCHW


# ----------------------- pure-JAX reference (for checking) ------------------ #

def _ref_basic_block(x_nchw, params, in_planes, planes, stride):
    x = jnp.transpose(x_nchw, (0, 2, 3, 1)).astype(jnp.float32)

    def conv(v, w_oihw, st, pad):
        w = jnp.transpose(w_oihw, (2, 3, 1, 0))   # OIHW -> HWIO
        return lax.conv_general_dilated(
            v, w, (st, st), ((pad, pad), (pad, pad)),
            dimension_numbers=("NHWC", "HWIO", "NHWC"))

    def bn(v, g, b):
        mu = jnp.mean(v, axis=(0, 1, 2), keepdims=True)
        var = jnp.mean((v - mu) ** 2, axis=(0, 1, 2), keepdims=True)
        return (v - mu) * lax.rsqrt(var + EPS) * g + b

    out = jax.nn.relu(bn(conv(x, params["w1"], stride, 1), params["g1"], params["b1"]))
    out = bn(conv(out, params["w2"], 1, 1), params["g2"], params["b2"])
    if stride != 1 or in_planes != planes:
        sc = bn(conv(x, params["wsc"], stride, 0), params["gsc"], params["bsc"])
    else:
        sc = x
    return jnp.transpose(jax.nn.relu(out + sc), (0, 3, 1, 2))


# ----------------------------------- main ------------------------------------ #

if __name__ == "__main__":
    key = jax.random.PRNGKey(0)
    kx, kp1, kp2 = jax.random.split(key, 3)

    x = jax.random.normal(kx, (2, 4, 16, 16), jnp.float32)   # NCHW

    # Case 1: downsampling block with conv shortcut (in=4, planes=8, stride=2).
    params1 = init_basic_block_params(kp1, 4, 8, 2)
    y1 = basic_block_forward(x, params1, 4, 8, 2)
    jax.block_until_ready(y1)
    assert y1.shape == (2, 8, 8, 8), y1.shape
    ref1 = _ref_basic_block(x, params1, 4, 8, 2)
    # bf16 MXU operands (f32 accumulation) vs an all-f32 reference -> looser tol.
    assert jnp.allclose(y1, ref1, atol=8e-2, rtol=8e-2), float(jnp.max(jnp.abs(y1 - ref1)))

    # Case 2: identity shortcut (in=planes=4, stride=1).
    params2 = init_basic_block_params(kp2, 4, 4, 1)
    y2 = basic_block_forward(x, params2, 4, 4, 1)
    jax.block_until_ready(y2)
    assert y2.shape == (2, 4, 16, 16), y2.shape
    ref2 = _ref_basic_block(x, params2, 4, 4, 1)
    assert jnp.allclose(y2, ref2, atol=8e-2, rtol=8e-2), float(jnp.max(jnp.abs(y2 - ref2)))

    print("KERNEL_OK")
</pallas_src>

<mosaic_0001>
module attributes {stable_mosaic.version = 11 : i64} {
  func.func @_conv1_kernel(%arg0: i32, %arg1: memref<4x9x16x128xf32, #tpu.memory_space<vmem>>, %arg2: memref<1152x128xbf16, #tpu.memory_space<vmem>>, %arg3: memref<1x8x8x128xf32, #tpu.memory_space<vmem>>, %arg4: memref<1x2x128xf32, #tpu.memory_space<vmem>>) attributes {dimension_semantics = [#tpu.dimension_semantics<parallel>], iteration_bounds = array<i64: 2>, scalar_prefetch = 0 : i64, scratch_operands = 0 : i64, tpu.core_type = #tpu.core_type<tc>, window_params = [{transform_indices = @transform_0, window_bounds = array<i64: 4, 9, 16, 128>}, {pipeline_mode = #tpu.pipeline_mode<synchronous>, transform_indices = @transform_1, window_bounds = array<i64: 1152, 128>}, {transform_indices = @transform_2, window_bounds = array<i64: 1, 8, 8, 128>}, {transform_indices = @transform_3, window_bounds = array<i64: 1, 2, 128>}]} {
    %c0 = arith.constant 0 : index
    %c0_0 = arith.constant 0 : index
    %c0_1 = arith.constant 0 : index
    %c0_2 = arith.constant 0 : index
    %0 = vector.load %arg1[%c0, %c0_0, %c0_1, %c0_2] : memref<4x9x16x128xf32, #tpu.memory_space<vmem>>, vector<1x8x8x128xf32>
    %1 = vector.shape_cast %0 : vector<1x8x8x128xf32> to vector<8x8x128xf32>
    %2 = vector.shape_cast %1 : vector<8x8x128xf32> to vector<64x128xf32>
    %3 = arith.truncf %2 : vector<64x128xf32> to vector<64x128xbf16>
    %c1 = arith.constant 1 : index
    %c0_3 = arith.constant 0 : index
    %c0_4 = arith.constant 0 : index
    %c0_5 = arith.constant 0 : index
    %4 = vector.load %arg1[%c1, %c0_3, %c0_4, %c0_5] : memref<4x9x16x128xf32, #tpu.memory_space<vmem>>, vector<1x8x8x128xf32>
    %5 = vector.shape_cast %4 : vector<1x8x8x128xf32> to vector<8x8x128xf32>
    %6 = vector.shape_cast %5 : vector<8x8x128xf32> to vector<64x128xf32>
    %7 = arith.truncf %6 : vector<64x128xf32> to vector<64x128xbf16>
    %c0_6 = arith.constant 0 : index
    %c0_7 = arith.constant 0 : index
    %c1_8 = arith.constant 1 : index
    %c0_9 = arith.constant 0 : index
    %8 = vector.load %arg1[%c0_6, %c0_7, %c1_8, %c0_9] : memref<4x9x16x128xf32, #tpu.memory_space<vmem>>, vector<1x8x8x128xf32>
    %9 = vector.shape_cast %8 : vector<1x8x8x128xf32> to vector<8x8x128xf32>
    %10 = vector.shape_cast %9 : vector<8x8x128xf32> to vector<64x128xf32>
    %11 = arith.truncf %10 : vector<64x128xf32> to vector<64x128xbf16>
    %c2 = arith.constant 2 : index
    %c0_10 = arith.constant 0 : index
    %c0_11 = arith.constant 0 : index
    %c0_12 = arith.constant 0 : index
    %12 = vector.load %arg1[%c2, %c0_10, %c0_11, %c0_12] : memref<4x9x16x128xf32, #tpu.memory_space<vmem>>, vector<1x8x8x128xf32>
    %13 = vector.shape_cast %12 : vector<1x8x8x128xf32> to vector<8x8x128xf32>
    %14 = vector.shape_cast %13 : vector<8x8x128xf32> to vector<64x128xf32>
    %15 = arith.truncf %14 : vector<64x128xf32> to vector<64x128xbf16>
    %c3 = arith.constant 3 : index
    %c0_13 = arith.constant 0 : index
    %c0_14 = arith.constant 0 : index
    %c0_15 = arith.constant 0 : index
    %16 = vector.load %arg1[%c3, %c0_13, %c0_14, %c0_15] : memref<4x9x16x128xf32, #tpu.memory_space<vmem>>, vector<1x8x8x128xf32>
    %17 = vector.shape_cast %16 : vector<1x8x8x128xf32> to vector<8x8x128xf32>
    %18 = vector.shape_cast %17 : vector<8x8x128xf32> to vector<64x128xf32>
    %19 = arith.truncf %18 : vector<64x128xf32> to vector<64x128xbf16>
    %c2_16 = arith.constant 2 : index
    %c0_17 = arith.constant 0 : index
    %c1_18 = arith.constant 1 : index
    %c0_19 = arith.constant 0 : index
    %20 = vector.load %arg1[%c2_16, %c0_17, %c1_18, %c0_19] : memref<4x9x16x128xf32, #tpu.memory_space<vmem>>, vector<1x8x8x128xf32>
    %21 = vector.shape_cast %20 : vector<1x8x8x128xf32> to vector<8x8x128xf32>
    %22 = vector.shape_cast %21 : vector<8x8x128xf32> to vector<64x128xf32>
    %23 = arith.truncf %22 : vector<64x128xf32> to vector<64x128xbf16>
    %c0_20 = arith.constant 0 : index
    %c1_21 = arith.constant 1 : index
    %c0_22 = arith.constant 0 : index
    %c0_23 = arith.constant 0 : index
    %24 = vector.load %arg1[%c0_20, %c1_21, %c0_22, %c0_23] : memref<4x9x16x128xf32, #tpu.memory_space<vmem>>, vector<1x8x8x128xf32>
    %25 = vector.shape_cast %24 : vector<1x8x8x128xf32> to vector<8x8x128xf32>
    %26 = vector.shape_cast %25 : vector<8x8x128xf32> to vector<64x128xf32>
    %27 = arith.truncf %26 : vector<64x128xf32> to vector<64x128xbf16>
    %c1_24 = arith.constant 1 : index
    %c1_25 = arith.constant 1 : index
    %c0_26 = arith.constant 0 : index
    %c0_27 = arith.constant 0 : index
    %28 = vector.load %arg1[%c1_24, %c1_25, %c0_26, %c0_27] : memref<4x9x16x128xf32, #tpu.memory_space<vmem>>, vector<1x8x8x128xf32>
    %29 = vector.shape_cast %28 : vector<1x8x8x128xf32> to vector<8x8x128xf32>
    %30 = vector.shape_cast %29 : vector<8x8x128xf32> to vector<64x128xf32>
    %31 = arith.truncf %30 : vector<64x128xf32> to vector<64x128xbf16>
    %c0_28 = arith.constant 0 : index
    %c1_29 = arith.constant 1 : index
    %c1_30 = arith.constant 1 : index
    %c0_31 = arith.constant 0 : index
    %32 = vector.load %arg1[%c0_28, %c1_29, %c1_30, %c0_31] : memref<4x9x16x128xf32, #tpu.memory_space<vmem>>, vector<1x8x8x128xf32>
    %33 = vector.shape_cast %32 : vector<1x8x8x128xf32> to vector<8x8x128xf32>
    %34 = vector.shape_cast %33 : vector<8x8x128xf32> to vector<64x128xf32>
    %35 = arith.truncf %34 : vector<64x128xf32> to vector<64x128xbf16>
    %36 = tpu.concatenate %3, %7, %11, %15, %19, %23, %27, %31, %35 in 1 : vector<64x128xbf16>, vector<64x128xbf16>, vector<64x128xbf16>, vector<64x128xbf16>, vector<64x128xbf16>, vector<64x128xbf16>, vector<64x128xbf16>, vector<64x128xbf16>, vector<64x128xbf16> -> vector<64x1152xbf16>
    %c0_32 = arith.constant 0 : index
    %c0_33 = arith.constant 0 : index
    %37 = vector.load %arg2[%c0_32, %c0_33] : memref<1152x128xbf16, #tpu.memory_space<vmem>>, vector<1152x128xbf16>
    %cst = arith.constant dense<0.000000e+00> : vector<64x128xf32>
    %38 = tpu.matmul %36, %37, %cst {dimension_numbers = #tpu.dot_dimension_numbers<[1], [0], [0], [1], [0, 0, 1, 1], [], []>} : vector<64x1152xbf16>, vector<1152x128xbf16>, vector<64x128xf32> -> vector<64x128xf32>
    %39 = vector.shape_cast %38 : vector<64x128xf32> to vector<8x8x128xf32>
    %c0_34 = arith.constant 0 : index
    %c0_35 = arith.constant 0 : index
    %c0_36 = arith.constant 0 : index
    %c0_37 = arith.constant 0 : index
    %40 = vector.load %arg3[%c0_34, %c0_35, %c0_36, %c0_37] : memref<1x8x8x128xf32, #tpu.memory_space<vmem>>, vector<1x8x8x128xf32>
    %41 = vector.shape_cast %40 : vector<1x8x8x128xf32> to vector<8x8x128xf32>
    %42 = vector.shape_cast %39 : vector<8x8x128xf32> to vector<1x8x8x128xf32>
    tpu.vector_store %arg3[%c0_34, %c0_35, %c0_36, %c0_37], %42 {strides = array<i32>} : memref<1x8x8x128xf32, #tpu.memory_space<vmem>>, vector<1x8x8x128xf32>,
    %cst_38 = arith.constant dense<0.000000e+00> : vector<128xf32>
    %43 = vector.multi_reduction <add>, %38, %cst_38 [0] : vector<64x128xf32> to vector<128xf32>
    %44 = vector.shape_cast %43 : vector<128xf32> to vector<1x128xf32>
    %45 = arith.mulf %38, %38 : vector<64x128xf32>
    %cst_39 = arith.constant dense<0.000000e+00> : vector<128xf32>
    %46 = vector.multi_reduction <add>, %45, %cst_39 [0] : vector<64x128xf32> to vector<128xf32>
    %47 = vector.shape_cast %46 : vector<128xf32> to vector<1x128xf32>
    %48 = tpu.concatenate %44, %47 in 0 : vector<1x128xf32>, vector<1x128xf32> -> vector<2x128xf32>
    %c0_40 = arith.constant 0 : index
    %c0_41 = arith.constant 0 : index
    %c0_42 = arith.constant 0 : index
    %49 = vector.load %arg4[%c0_40, %c0_41, %c0_42] : memref<1x2x128xf32, #tpu.memory_space<vmem>>, vector<1x2x128xf32>
    %50 = vector.shape_cast %49 : vector<1x2x128xf32> to vector<2x128xf32>
    %51 = vector.shape_cast %48 : vector<2x128xf32> to vector<1x2x128xf32>
    tpu.vector_store %arg4[%c0_40, %c0_41, %c0_42], %51 {strides = array<i32>} : memref<1x2x128xf32, #tpu.memory_space<vmem>>, vector<1x2x128xf32>,
    return
  }
  func.func @transform_0(%arg0: i32) -> (i32, i32, i32, i32) {
    %c0_i32 = arith.constant 0 : i32
    %c0_i32_0 = arith.constant 0 : i32
    %c0_i32_1 = arith.constant 0 : i32
    %c0_i32_2 = arith.constant 0 : i32
    return %arg0, %c0_i32, %c0_i32_0, %c0_i32_1 : i32, i32, i32, i32
  }
  func.func @transform_1(%arg0: i32) -> (i32, i32) {
    %c0_i32 = arith.constant 0 : i32
    %c0_i32_0 = arith.constant 0 : i32
    %c0_i32_1 = arith.constant 0 : i32
    return %c0_i32, %c0_i32_0 : i32, i32
  }
  func.func @transform_2(%arg0: i32) -> (i32, i32, i32, i32) {
    %c0_i32 = arith.constant 0 : i32
    %c0_i32_0 = arith.constant 0 : i32
    %c0_i32_1 = arith.constant 0 : i32
    %c0_i32_2 = arith.constant 0 : i32
    return %arg0, %c0_i32, %c0_i32_0, %c0_i32_1 : i32, i32, i32, i32
  }
  func.func @transform_3(%arg0: i32) -> (i32, i32, i32) {
    %c0_i32 = arith.constant 0 : i32
    %c0_i32_0 = arith.constant 0 : i32
    %c0_i32_1 = arith.constant 0 : i32
    return %arg0, %c0_i32, %c0_i32_0 : i32, i32, i32
  }
}

</mosaic_0001>

<llo_original>
// kernel: tpu_custom_call.1
$region0: #{tpu_custom_call.1}
  #allocation0 [shape = 'u32[]', space=smem, size = 0x4, offset = 0x4, fixed_abs, tag = 'smem constant byte address 0x4 - core index']
  #allocation1 [shape = 'u32[144,128]{1,0:T(1,128)}', space=vmem, size = 0x12000, scoped, tag = 'internal scratch']
  %s0 = inlined_call_operand.hbm [shape: f32[8,9,16,128], index: 0, kind: input, shape index: {}]
  %s1 = inlined_call_operand.hbm [shape: bf16[1152,128], index: 1, kind: input, shape index: {}]
  %s2 = inlined_call_operand.hbm [shape: f32[2,8,8,128], index: 2, kind: output, shape index: {0}]
  %s3 = inlined_call_operand.hbm [shape: f32[2,2,128], index: 3, kind: output, shape index: {1}]
  %4 = xla_tuple %s2, %s3
  %s5 = sld [smem:[#allocation0]]
  $region57: #{tpu_custom_call.1} parent=0
    _
  %s7 = ssub.s32 1, %s5
  %s8 = scalar_select 0, %s7, %s5
  $region1: #{tpu_custom_call.1} parent=0
    #allocation2 [shape = 'u8[589824]{0}', space=vmem, size = 0x90000, scoped, tag = 'input window, operand 0']
    #allocation3 [shape = 's32[2]{0}', space=sflag, size = 0x8, scoped, tag = 'scoped memory for tpu_custom_call.1']
    #allocation4 [shape = 's32[2]{0}', space=sflag, size = 0x8, scoped, tag = 'scoped memory for tpu_custom_call.1']
    #allocation5 [shape = 'u8[294912]{0}', space=vmem, size = 0x48000, scoped, tag = 'input window, operand 1, single buffered']
    #allocation6 [shape = 's32[1]{0}', space=sflag, size = 0x4, scoped, tag = 'scoped memory for tpu_custom_call.1']
    #allocation7 [shape = 'u8[65536]{0}', space=vmem, size = 0x10000, scoped, tag = 'output window, operand 0']
    #allocation8 [shape = 'u8[2048]{0}', space=vmem, size = 0x800, scoped, tag = 'output window, operand 1']
    #allocation9 [shape = 's32[2]{0}', space=sflag, size = 0x8, scoped, tag = 'scoped memory for tpu_custom_call.1']
    %9 = vsyncpa [#allocation3], 0
    %s10 = scalar_lea.sflag [#allocation3], 1
    %11 = vsyncpa %s10, 0
    %12 = vsyncpa [#allocation6], 0
    %13 = vsyncpa [#allocation4], 0
    %s14 = scalar_lea.sflag [#allocation4], 1
    %15 = vsyncpa %s14, 0
    %16 = vsyncpa [#allocation9], 0
    %s17 = scalar_lea.sflag [#allocation9], 1
    %18 = vsyncpa %s17, 0
    loop: start=0, step=1, limit=4
    $region2: #{tpu_custom_call.1} parent=1 // loop_pre_header
      _
    $region3: #{tpu_custom_call.1} parent=1 // loop_header
      %s20 = sphi 0, %s24
      %p21 = scmp.ge.s32.totalorder %s20, 4
      %s30 = sphi 0, %s32
      %s33 = sphi 0, %s30
      %s34 = sphi 0, %s33
      %s50 = sphi 0, %s34
      %s54 = sphi 0, %s54
      %s56 = sphi 0, %s54
      %s57 = sphi 0, %s56
      %s71 = sphi 0, %s57
      %s77 = sphi 0, %s79
      %s80 = sphi 0, %s77
      %s81 = sphi 0, %s80
      %s97 = sphi 0, %s81
      %s103 = sphi 0, %s105
      %s106 = sphi 0, %s103
      %s107 = sphi 0, %s106
      %s123 = sphi 0, %s107
    $region4: #{tpu_custom_call.1} parent=1 // loop_header_branch
      %23 = sbr.rel (%p21) target = $region8
    $region5: #{tpu_custom_call.1} parent=1 // loop_body
      %s25 = ssub.s32 %s20, 1
      %s26 = ssub.s32 %s20, 2
      %s27 = sadd.s32 %s20, 1
      %s28 = ssub.s32 %s20, %s27
      %p29 = scmp.eq.s32.totalorder %s28, 0
      %s31 = sadd.s32 %s30, 1
      %s32 = scalar_select %p29, %s30, %s31
      %p35 = pneg %p29
      %p36 = scmp.eq.s32.totalorder %s20, 1
      %p37 = por %p35, %p36
      %p38 = scmp.ne.s32.totalorder %s30, %s33
      %p39 = scmp.eq.s32.totalorder %s20, 0
      %p40 = por %p38, %p39
      %p41 = scmp.ne.s32.totalorder %s30, %s33
      %p42 = scmp.eq.s32.totalorder %s25, 1
      %p43 = por %p41, %p42
      %p44 = scmp.ne.s32.totalorder %s33, %s34
      %p45 = scmp.eq.s32.totalorder %s25, 0
      %p46 = por %p44, %p45
      %p47 = scmp.ne.s32.totalorder %s33, %s34
      %p48 = scmp.eq.s32.totalorder %s26, 1
      %p49 = por %p47, %p48
      %p51 = scmp.ne.s32.totalorder %s34, %s50
      %p52 = scmp.eq.s32.totalorder %s26, 0
      %p53 = por %p51, %p52
      %s55 = sadd.s32 %s54, 1
      %p58 = scmp.eq.s32.totalorder %s20, 1
      %p59 = scmp.ne.s32.totalorder %s54, %s56
      %p60 = scmp.eq.s32.totalorder %s20, 0
      %p61 = por %p59, %p60
      %p62 = scmp.ne.s32.totalorder %s54, %s56
      %p63 = scmp.eq.s32.totalorder %s25, 1
      %p64 = por %p62, %p63
      %p65 = scmp.ne.s32.totalorder %s56, %s57
      %p66 = scmp.eq.s32.totalorder %s25, 0
      %p67 = por %p65, %p66
      %p68 = scmp.ne.s32.totalorder %s56, %s57
      %p69 = scmp.eq.s32.totalorder %s26, 1
      %p70 = por %p68, %p69
      %p72 = scmp.ne.s32.totalorder %s57, %s71
      %p73 = scmp.eq.s32.totalorder %s26, 0
      %p74 = por %p72, %p73
      %s75 = ssub.s32 %s20, %s27
      %p76 = scmp.eq.s32.totalorder %s75, 0
      %s78 = sadd.s32 %s77, 1
      %s79 = scalar_select %p76, %s77, %s78
      %p82 = pneg %p76
      %p83 = scmp.eq.s32.totalorder %s20, 1
      %p84 = por %p82, %p83
      %p85 = scmp.ne.s32.totalorder %s77, %s80
      %p86 = scmp.eq.s32.totalorder %s20, 0
      %p87 = por %p85, %p86
      %p88 = scmp.ne.s32.totalorder %s77, %s80
      %p89 = scmp.eq.s32.totalorder %s25, 1
      %p90 = por %p88, %p89
      %p91 = scmp.ne.s32.totalorder %s80, %s81
      %p92 = scmp.eq.s32.totalorder %s25, 0
      %p93 = por %p91, %p92
      %p94 = scmp.ne.s32.totalorder %s80, %s81
      %p95 = scmp.eq.s32.totalorder %s26, 1
      %p96 = por %p94, %p95
      %p98 = scmp.ne.s32.totalorder %s81, %s97
      %p99 = scmp.eq.s32.totalorder %s26, 0
      %p100 = por %p98, %p99
      %s101 = ssub.s32 %s20, %s27
      %p102 = scmp.eq.s32.totalorder %s101, 0
      %s104 = sadd.s32 %s103, 1
      %s105 = scalar_select %p102, %s103, %s104
      %p108 = pneg %p102
      %p109 = scmp.eq.s32.totalorder %s20, 1
      %p110 = por %p108, %p109
      %p111 = scmp.ne.s32.totalorder %s103, %s106
      %p112 = scmp.eq.s32.totalorder %s20, 0
      %p113 = por %p111, %p112
      %p114 = scmp.ne.s32.totalorder %s103, %s106
      %p115 = scmp.eq.s32.totalorder %s25, 1
      %p116 = por %p114, %p115
      %p117 = scmp.ne.s32.totalorder %s106, %s107
      %p118 = scmp.eq.s32.totalorder %s25, 0
      %p119 = por %p117, %p118
      %p120 = scmp.ne.s32.totalorder %s106, %s107
      %p121 = scmp.eq.s32.totalorder %s26, 1
      %p122 = por %p120, %p121
      %p124 = scmp.ne.s32.totalorder %s107, %s123
      %p125 = scmp.eq.s32.totalorder %s26, 0
      %p126 = por %p124, %p125
      %p127 = scmp.le.s32.totalorder 1, %s20
      %p128 = scmp.lt.s32.totalorder %s20, 3
      %p129 = pnand %p127, %p128
      %p130 = pneg %p129
      // Predicated region
      $region9: #{tpu_custom_call.1} parent=5 // pred_check
        _
      $region10: #{tpu_custom_call.1} parent=5 // pred_check_branch
        %132 = sbr.rel (%p129) target = $region12
      $region11: #{tpu_custom_call.1} parent=5 // pred_region
        %s133 = ssub.s32 %s20, 1
        // Predicated region
        $region13: #{tpu_custom_call.1} parent=11 // pred_check
          %p134 = pneg %p67
        $region14: #{tpu_custom_call.1} parent=11 // pred_check_branch
          %136 = sbr.rel (%p134) target = $region16
        $region15: #{tpu_custom_call.1} parent=11 // pred_region
          %s138 = ssub.s32 9216, 9216
          %139 = vsyncadd [#allocation6], %s138
          %s140 = sshll.u32 [#allocation5], 4
          %s141 = int_to_ptr.vmem [resolvable:$true] %s140
          %146 = dma.hbm_to_vmem [thread:$0]  %s1, 9216, %s141, [#allocation6], 64, 64, 4
        $region16: #{tpu_custom_call.1} parent=11 // pred_fallthru
          _
      $region12: #{tpu_custom_call.1} parent=5 // pred_fallthru
        _
      %p147 = scmp.lt.s32.totalorder %s20, 2
      // Predicated region
      $region17: #{tpu_custom_call.1} parent=5 // pred_check
        %p148 = pneg %p147
      $region18: #{tpu_custom_call.1} parent=5 // pred_check_branch
        %150 = sbr.rel (%p148) target = $region20
      $region19: #{tpu_custom_call.1} parent=5 // pred_region
        // Predicated region
        $region21: #{tpu_custom_call.1} parent=19 // pred_check
          %p151 = pneg %p40
        $region22: #{tpu_custom_call.1} parent=19 // pred_check_branch
          %153 = sbr.rel (%p151) target = $region24
        $region23: #{tpu_custom_call.1} parent=19 // pred_region
          %s154 = sand.u32 %s30, 1
          %s155 = scalar_lea.sflag [#allocation3], %s154
          %s156 = sand.u32 %s30, 1
          %s157 = smul.addr %s156, 576
          %s158 = scalar_lea.vmem [#allocation2], %s157
          %s159 = smul.u32 4, %s20
          %s161 = ssub.s32 9216, 9216
          %162 = vsyncadd %s155, %s161
          %s163 = smul.addr %s159, 18
          %s164 = smul.addr %s163, 128
          %s165 = scalar_lea.hbm %s0, %s164
          %s166 = sshll.u32 %s158, 4
          %s167 = int_to_ptr.vmem [resolvable:$true] %s166
          %172 = dma.hbm_to_vmem [thread:$0]  %s165, 9216, %s167, %s155, 128, 128, 8
        $region24: #{tpu_custom_call.1} parent=19 // pred_fallthru
          _
      $region20: #{tpu_custom_call.1} parent=5 // pred_fallthru
        _
      %p173 = scmp.le.s32.totalorder 1, %s20
      %p174 = scmp.lt.s32.totalorder %s20, 3
      %p175 = pnand %p173, %p174
      %p176 = pneg %p175
      // Predicated region
      $region25: #{tpu_custom_call.1} parent=5 // pred_check
        _
      $region26: #{tpu_custom_call.1} parent=5 // pred_check_branch
        %178 = sbr.rel (%p175) target = $region28
      $region27: #{tpu_custom_call.1} parent=5 // pred_region
        %s179 = ssub.s32 %s20, 1
        %s180 = sand.u32 %s33, 1
        %s181 = scalar_lea.sflag [#allocation3], %s180
        %s182 = sand.u32 %s33, 1
        %s183 = smul.addr %s182, 576
        %s184 = scalar_lea.vmem [#allocation2], %s183
        // Predicated region
        $region29: #{tpu_custom_call.1} parent=27 // pred_check
          %p185 = pneg %p46
        $region30: #{tpu_custom_call.1} parent=27 // pred_check_branch
          %187 = sbr.rel (%p185) target = $region32
        $region31: #{tpu_custom_call.1} parent=27 // pred_region
          %188 = dma.done %s181, 9216
        $region32: #{tpu_custom_call.1} parent=27 // pred_fallthru
          _
        // Predicated region
        $region33: #{tpu_custom_call.1} parent=27 // pred_check
          %p189 = pneg %p67
        $region34: #{tpu_custom_call.1} parent=27 // pred_check_branch
          %191 = sbr.rel (%p189) target = $region36
        $region35: #{tpu_custom_call.1} parent=27 // pred_region
          %192 = dma.done [#allocation6], 9216
        $region36: #{tpu_custom_call.1} parent=27 // pred_fallthru
          _
        %s193 = sand.u32 %s33, 1
        %s194 = scalar_lea.sflag [#allocation3], %s193
        %s195 = sand.u32 %s33, 1
        %s196 = smul.addr %s195, 576
        %s197 = scalar_lea.vmem [#allocation2], %s196
        %p198 = pneg %p46
        %p199 = pneg %p43
        %p200 = pneg %p67
        %p201 = pneg %p64
        %p202 = pneg %p93
        %p203 = pneg %p90
        %s204 = sand.u32 %s80, 1
        %s205 = scalar_lea.sflag [#allocation4], %s204
        %s206 = sand.u32 %s80, 1
        %s207 = smul.addr %s206, 64
        %s208 = scalar_lea.vmem [#allocation7], %s207
        %p209 = pneg %p119
        %p210 = pneg %p116
        %s211 = sand.u32 %s106, 1
        %s212 = scalar_lea.sflag [#allocation9], %s211
        %s213 = sand.u32 %s106, 1
        %s214 = smul.addr %s213, 2
        %s215 = scalar_lea.vmem [#allocation8], %s214
        %s216 = smul.u32 4, %s25
        %v218 = vld [vmem:[%s184] sm:$0xff]
        %v219 = vld [vmem:[%s184 + $0x10] sm:$0xff]
        %v220 = vld [vmem:[%s184 + $0x20] sm:$0xff]
        %v221 = vld [vmem:[%s184 + $0x30] sm:$0xff]
        %v222 = vld [vmem:[%s184 + $0x40] sm:$0xff]
        %v223 = vld [vmem:[%s184 + $0x50] sm:$0xff]
        %v224 = vld [vmem:[%s184 + $0x60] sm:$0xff]
        %v225 = vld [vmem:[%s184 + $0x70] sm:$0xff]
        %v226 = vpack.c.bf16 %v219, %v218
        %v227 = vpack.c.bf16 %v221, %v220
        %v228 = vpack.c.bf16 %v223, %v222
        %v229 = vpack.c.bf16 %v225, %v224
        %s230 = scalar_lea.vmem %s184, 144 [#allocation2]
        %v231 = vld [vmem:[%s230] sm:$0xff]
        %v232 = vld [vmem:[%s230 + $0x10] sm:$0xff]
        %v233 = vld [vmem:[%s230 + $0x20] sm:$0xff]
        %v234 = vld [vmem:[%s230 + $0x30] sm:$0xff]
        %v235 = vld [vmem:[%s230 + $0x40] sm:$0xff]
        %v236 = vld [vmem:[%s230 + $0x50] sm:$0xff]
        %v237 = vld [vmem:[%s230 + $0x60] sm:$0xff]
        %v238 = vld [vmem:[%s230 + $0x70] sm:$0xff]
        %v239 = vpack.c.bf16 %v232, %v231
        %v240 = vpack.c.bf16 %v234, %v233
        %v241 = vpack.c.bf16 %v236, %v235
        %v242 = vpack.c.bf16 %v238, %v237
        %v243 = vld [vmem:[%s184 + $0x1] sm:$0xff]
        %v244 = vld [vmem:[%s184 + $0x11] sm:$0xff]
        %v245 = vld [vmem:[%s184 + $0x21] sm:$0xff]
        %v246 = vld [vmem:[%s184 + $0x31] sm:$0xff]
        %v247 = vld [vmem:[%s184 + $0x41] sm:$0xff]
        %v248 = vld [vmem:[%s184 + $0x51] sm:$0xff]
        %v249 = vld [vmem:[%s184 + $0x61] sm:$0xff]
        %v250 = vld [vmem:[%s184 + $0x71] sm:$0xff]
        %v251 = vpack.c.bf16 %v244, %v243
        %v252 = vpack.c.bf16 %v246, %v245
        %v253 = vpack.c.bf16 %v248, %v247
        %v254 = vpack.c.bf16 %v250, %v249
        %s255 = scalar_lea.vmem %s184, 288 [#allocation2]
        %v256 = vld [vmem:[%s255] sm:$0xff]
        %v257 = vld [vmem:[%s255 + $0x10] sm:$0xff]
        %v258 = vld [vmem:[%s255 + $0x20] sm:$0xff]
        %v259 = vld [vmem:[%s255 + $0x30] sm:$0xff]
        %v260 = vld [vmem:[%s255 + $0x40] sm:$0xff]
        %v261 = vld [vmem:[%s255 + $0x50] sm:$0xff]
        %v262 = vld [vmem:[%s255 + $0x60] sm:$0xff]
        %v263 = vld [vmem:[%s255 + $0x70] sm:$0xff]
        %v264 = vpack.c.bf16 %v257, %v256
        %v265 = vpack.c.bf16 %v259, %v258
        %v266 = vpack.c.bf16 %v261, %v260
        %v267 = vpack.c.bf16 %v263, %v262
        %s268 = scalar_lea.vmem %s184, 432 [#allocation2]
        %v269 = vld [vmem:[%s268] sm:$0xff]
        %v270 = vld [vmem:[%s268 + $0x10] sm:$0xff]
        %v271 = vld [vmem:[%s268 + $0x20] sm:$0xff]
        %v272 = vld [vmem:[%s268 + $0x30] sm:$0xff]
        %v273 = vld [vmem:[%s268 + $0x40] sm:$0xff]
        %v274 = vld [vmem:[%s268 + $0x50] sm:$0xff]
        %v275 = vld [vmem:[%s268 + $0x60] sm:$0xff]
        %v276 = vld [vmem:[%s268 + $0x70] sm:$0xff]
        %v277 = vpack.c.bf16 %v270, %v269
        %v278 = vpack.c.bf16 %v272, %v271
        %v279 = vpack.c.bf16 %v274, %v273
        %v280 = vpack.c.bf16 %v276, %v275
        %v281 = vld [vmem:[%s255 + $0x1] sm:$0xff]
        %v282 = vld [vmem:[%s255 + $0x11] sm:$0xff]
        %v283 = vld [vmem:[%s255 + $0x21] sm:$0xff]
        %v284 = vld [vmem:[%s255 + $0x31] sm:$0xff]
        %v285 = vld [vmem:[%s255 + $0x41] sm:$0xff]
        %v286 = vld [vmem:[%s255 + $0x51] sm:$0xff]
        %v287 = vld [vmem:[%s255 + $0x61] sm:$0xff]
        %v288 = vld [vmem:[%s255 + $0x71] sm:$0xff]
        %v289 = vpack.c.bf16 %v282, %v281
        %v290 = vpack.c.bf16 %v284, %v283
        %v291 = vpack.c.bf16 %v286, %v285
        %v292 = vpack.c.bf16 %v288, %v287
        %s293 = scalar_lea.vmem %s184, 16 [#allocation2]
        %v294 = vld [vmem:[%s293] sm:$0xff]
        %v295 = vld [vmem:[%s293 + $0x10] sm:$0xff]
        %v296 = vld [vmem:[%s293 + $0x20] sm:$0xff]
        %v297 = vld [vmem:[%s293 + $0x30] sm:$0xff]
        %v298 = vld [vmem:[%s293 + $0x40] sm:$0xff]
        %v299 = vld [vmem:[%s293 + $0x50] sm:$0xff]
        %v300 = vld [vmem:[%s293 + $0x60] sm:$0xff]
        %v301 = vld [vmem:[%s293 + $0x70] sm:$0xff]
        %v302 = vpack.c.bf16 %v295, %v294
        %v303 = vpack.c.bf16 %v297, %v296
        %v304 = vpack.c.bf16 %v299, %v298
        %v305 = vpack.c.bf16 %v301, %v300
        %s306 = scalar_lea.vmem %s184, 160 [#allocation2]
        %v307 = vld [vmem:[%s306] sm:$0xff]
        %v308 = vld [vmem:[%s306 + $0x10] sm:$0xff]
        %v309 = vld [vmem:[%s306 + $0x20] sm:$0xff]
        %v310 = vld [vmem:[%s306 + $0x30] sm:$0xff]
        %v311 = vld [vmem:[%s306 + $0x40] sm:$0xff]
        %v312 = vld [vmem:[%s306 + $0x50] sm:$0xff]
        %v313 = vld [vmem:[%s306 + $0x60] sm:$0xff]
        %v314 = vld [vmem:[%s306 + $0x70] sm:$0xff]
        %v315 = vpack.c.bf16 %v308, %v307
        %v316 = vpack.c.bf16 %v310, %v309
        %v317 = vpack.c.bf16 %v312, %v311
        %v318 = vpack.c.bf16 %v314, %v313
        %v319 = vld [vmem:[%s293 + $0x1] sm:$0xff]
        %v320 = vld [vmem:[%s293 + $0x11] sm:$0xff]
        %v321 = vld [vmem:[%s293 + $0x21] sm:$0xff]
        %v322 = vld [vmem:[%s293 + $0x31] sm:$0xff]
        %v323 = vld [vmem:[%s293 + $0x41] sm:$0xff]
        %v324 = vld [vmem:[%s293 + $0x51] sm:$0xff]
        %v325 = vld [vmem:[%s293 + $0x61] sm:$0xff]
        %v326 = vld [vmem:[%s293 + $0x71] sm:$0xff]
        %v327 = vpack.c.bf16 %v320, %v319
        %v328 = vpack.c.bf16 %v322, %v321
        %v329 = vpack.c.bf16 %v324, %v323
        %v330 = vpack.c.bf16 %v326, %v325
        %v331 = vld [vmem:[#allocation5] sm:$0xf]
        %v332 = vld [vmem:[#allocation5 + $0x4] sm:$0xf]
        %v333 = vld [vmem:[#allocation5 + $0x8] sm:$0xf]
        %v334 = vld [vmem:[#allocation5 + $0xc] sm:$0xf]
        %v335 = vld [vmem:[#allocation5 + $0x10] sm:$0xf]
        %v336 = vld [vmem:[#allocation5 + $0x14] sm:$0xf]
        %v337 = vld [vmem:[#allocation5 + $0x18] sm:$0xf]
        %v338 = vld [vmem:[#allocation5 + $0x1c] sm:$0xf]
        %v339 = vld [vmem:[#allocation5 + $0x20] sm:$0xf]
        %v340 = vld [vmem:[#allocation5 + $0x24] sm:$0xf]
        %v341 = vld [vmem:[#allocation5 + $0x28] sm:$0xf]
        %v342 = vld [vmem:[#allocation5 + $0x2c] sm:$0xf]
        %v343 = vld [vmem:[#allocation5 + $0x30] sm:$0xf]
        %v344 = vld [vmem:[#allocation5 + $0x34] sm:$0xf]
        %v345 = vld [vmem:[#allocation5 + $0x38] sm:$0xf]
        %v346 = vld [vmem:[#allocation5 + $0x3c] sm:$0xf]
        %v347 = vld [vmem:[#allocation5 + $0x40] sm:$0xf]
        %v348 = vld [vmem:[#allocation5 + $0x44] sm:$0xf]
        %v349 = vld [vmem:[#allocation5 + $0x48] sm:$0xf]
        %v350 = vld [vmem:[#allocation5 + $0x4c] sm:$0xf]
        %v351 = vld [vmem:[#allocation5 + $0x50] sm:$0xf]
        %v352 = vld [vmem:[#allocation5 + $0x54] sm:$0xf]
        %v353 = vld [vmem:[#allocation5 + $0x58] sm:$0xf]
        %v354 = vld [vmem:[#allocation5 + $0x5c] sm:$0xf]
        %v355 = vld [vmem:[#allocation5 + $0x60] sm:$0xf]
        %v356 = vld [vmem:[#allocation5 + $0x64] sm:$0xf]
        %v357 = vld [vmem:[#allocation5 + $0x68] sm:$0xf]
        %v358 = vld [vmem:[#allocation5 + $0x6c] sm:$0xf]
        %v359 = vld [vmem:[#allocation5 + $0x70] sm:$0xf]
        %v360 = vld [vmem:[#allocation5 + $0x74] sm:$0xf]
        %v361 = vld [vmem:[#allocation5 + $0x78] sm:$0xf]
        %v362 = vld [vmem:[#allocation5 + $0x7c] sm:$0xf]
        %v363 = vld [vmem:[#allocation5 + $0x80] sm:$0xf]
        %v364 = vld [vmem:[#allocation5 + $0x84] sm:$0xf]
        %v365 = vld [vmem:[#allocation5 + $0x88] sm:$0xf]
        %v366 = vld [vmem:[#allocation5 + $0x8c] sm:$0xf]
        %v367 = vld [vmem:[#allocation5 + $0x90] sm:$0xf]
        %v368 = vld [vmem:[#allocation5 + $0x94] sm:$0xf]
        %v369 = vld [vmem:[#allocation5 + $0x98] sm:$0xf]
        %v370 = vld [vmem:[#allocation5 + $0x9c] sm:$0xf]
        %v371 = vld [vmem:[#allocation5 + $0xa0] sm:$0xf]
        %v372 = vld [vmem:[#allocation5 + $0xa4] sm:$0xf]
        %v373 = vld [vmem:[#allocation5 + $0xa8] sm:$0xf]
        %v374 = vld [vmem:[#allocation5 + $0xac] sm:$0xf]
        %v375 = vld [vmem:[#allocation5 + $0xb0] sm:$0xf]
        %v376 = vld [vmem:[#allocation5 + $0xb4] sm:$0xf]
        %v377 = vld [vmem:[#allocation5 + $0xb8] sm:$0xf]
        %v378 = vld [vmem:[#allocation5 + $0xbc] sm:$0xf]
        %v379 = vld [vmem:[#allocation5 + $0xc0] sm:$0xf]
        %v380 = vld [vmem:[#allocation5 + $0xc4] sm:$0xf]
        %v381 = vld [vmem:[#allocation5 + $0xc8] sm:$0xf]
        %v382 = vld [vmem:[#allocation5 + $0xcc] sm:$0xf]
        %v383 = vld [vmem:[#allocation5 + $0xd0] sm:$0xf]
        %v384 = vld [vmem:[#allocation5 + $0xd4] sm:$0xf]
        %v385 = vld [vmem:[#allocation5 + $0xd8] sm:$0xf]
        %v386 = vld [vmem:[#allocation5 + $0xdc] sm:$0xf]
        %v387 = vld [vmem:[#allocation5 + $0xe0] sm:$0xf]
        %v388 = vld [vmem:[#allocation5 + $0xe4] sm:$0xf]
        %v389 = vld [vmem:[#allocation5 + $0xe8] sm:$0xf]
        %v390 = vld [vmem:[#allocation5 + $0xec] sm:$0xf]
        %v391 = vld [vmem:[#allocation5 + $0xf0] sm:$0xf]
        %v392 = vld [vmem:[#allocation5 + $0xf4] sm:$0xf]
        %v393 = vld [vmem:[#allocation5 + $0xf8] sm:$0xf]
        %v394 = vld [vmem:[#allocation5 + $0xfc] sm:$0xf]
        %v395 = vld [vmem:[#allocation5 + $0x100] sm:$0xf]
        %v396 = vld [vmem:[#allocation5 + $0x104] sm:$0xf]
        %v397 = vld [vmem:[#allocation5 + $0x108] sm:$0xf]
        %v398 = vld [vmem:[#allocation5 + $0x10c] sm:$0xf]
        %v399 = vld [vmem:[#allocation5 + $0x110] sm:$0xf]
        %v400 = vld [vmem:[#allocation5 + $0x114] sm:$0xf]
        %v401 = vld [vmem:[#allocation5 + $0x118] sm:$0xf]
        %v402 = vld [vmem:[#allocation5 + $0x11c] sm:$0xf]
        %v403 = vld [vmem:[#allocation5 + $0x120] sm:$0xf]
        %v404 = vld [vmem:[#allocation5 + $0x124] sm:$0xf]
        %v405 = vld [vmem:[#allocation5 + $0x128] sm:$0xf]
        %v406 = vld [vmem:[#allocation5 + $0x12c] sm:$0xf]
        %v407 = vld [vmem:[#allocation5 + $0x130] sm:$0xf]
        %v408 = vld [vmem:[#allocation5 + $0x134] sm:$0xf]
        %v409 = vld [vmem:[#allocation5 + $0x138] sm:$0xf]
        %v410 = vld [vmem:[#allocation5 + $0x13c] sm:$0xf]
        %v411 = vld [vmem:[#allocation5 + $0x140] sm:$0xf]
        %v412 = vld [vmem:[#allocation5 + $0x144] sm:$0xf]
        %v413 = vld [vmem:[#allocation5 + $0x148] sm:$0xf]
        %v414 = vld [vmem:[#allocation5 + $0x14c] sm:$0xf]
        %v415 = vld [vmem:[#allocation5 + $0x150] sm:$0xf]
        %v416 = vld [vmem:[#allocation5 + $0x154] sm:$0xf]
        %v417 = vld [vmem:[#allocation5 + $0x158] sm:$0xf]
        %v418 = vld [vmem:[#allocation5 + $0x15c] sm:$0xf]
        %v419 = vld [vmem:[#allocation5 + $0x160] sm:$0xf]
        %v420 = vld [vmem:[#allocation5 + $0x164] sm:$0xf]
        %v421 = vld [vmem:[#allocation5 + $0x168] sm:$0xf]
        %v422 = vld [vmem:[#allocation5 + $0x16c] sm:$0xf]
        %v423 = vld [vmem:[#allocation5 + $0x170] sm:$0xf]
        %v424 = vld [vmem:[#allocation5 + $0x174] sm:$0xf]
        %v425 = vld [vmem:[#allocation5 + $0x178] sm:$0xf]
        %v426 = vld [vmem:[#allocation5 + $0x17c] sm:$0xf]
        %v427 = vld [vmem:[#allocation5 + $0x180] sm:$0xf]
        %v428 = vld [vmem:[#allocation5 + $0x184] sm:$0xf]
        %v429 = vld [vmem:[#allocation5 + $0x188] sm:$0xf]
        %v430 = vld [vmem:[#allocation5 + $0x18c] sm:$0xf]
        %v431 = vld [vmem:[#allocation5 + $0x190] sm:$0xf]
        %v432 = vld [vmem:[#allocation5 + $0x194] sm:$0xf]
        %v433 = vld [vmem:[#allocation5 + $0x198] sm:$0xf]
        %v434 = vld [vmem:[#allocation5 + $0x19c] sm:$0xf]
        %v435 = vld [vmem:[#allocation5 + $0x1a0] sm:$0xf]
        %v436 = vld [vmem:[#allocation5 + $0x1a4] sm:$0xf]
        %v437 = vld [vmem:[#allocation5 + $0x1a8] sm:$0xf]
        %v438 = vld [vmem:[#allocation5 + $0x1ac] sm:$0xf]
        %v439 = vld [vmem:[#allocation5 + $0x1b0] sm:$0xf]
        %v440 = vld [vmem:[#allocation5 + $0x1b4] sm:$0xf]
        %v441 = vld [vmem:[#allocation5 + $0x1b8] sm:$0xf]
        %v442 = vld [vmem:[#allocation5 + $0x1bc] sm:$0xf]
        %v443 = vld [vmem:[#allocation5 + $0x1c0] sm:$0xf]
        %v444 = vld [vmem:[#allocation5 + $0x1c4] sm:$0xf]
        %v445 = vld [vmem:[#allocation5 + $0x1c8] sm:$0xf]
        %v446 = vld [vmem:[#allocation5 + $0x1cc] sm:$0xf]
        %v447 = vld [vmem:[#allocation5 + $0x1d0] sm:$0xf]
        %v448 = vld [vmem:[#allocation5 + $0x1d4] sm:$0xf]
        %v449 = vld [vmem:[#allocation5 + $0x1d8] sm:$0xf]
        %v450 = vld [vmem:[#allocation5 + $0x1dc] sm:$0xf]
        %v451 = vld [vmem:[#allocation5 + $0x1e0] sm:$0xf]
        %v452 = vld [vmem:[#allocation5 + $0x1e4] sm:$0xf]
        %v453 = vld [vmem:[#allocation5 + $0x1e8] sm:$0xf]
        %v454 = vld [vmem:[#allocation5 + $0x1ec] sm:$0xf]
        %v455 = vld [vmem:[#allocation5 + $0x1f0] sm:$0xf]
        %v456 = vld [vmem:[#allocation5 + $0x1f4] sm:$0xf]
        %v457 = vld [vmem:[#allocation5 + $0x1f8] sm:$0xf]
        %v458 = vld [vmem:[#allocation5 + $0x1fc] sm:$0xf]
        %v459 = vld [vmem:[#allocation5 + $0x200] sm:$0xf]
        %v460 = vld [vmem:[#allocation5 + $0x204] sm:$0xf]
        %v461 = vld [vmem:[#allocation5 + $0x208] sm:$0xf]
        %v462 = vld [vmem:[#allocation5 + $0x20c] sm:$0xf]
        %v463 = vld [vmem:[#allocation5 + $0x210] sm:$0xf]
        %v464 = vld [vmem:[#allocation5 + $0x214] sm:$0xf]
        %v465 = vld [vmem:[#allocation5 + $0x218] sm:$0xf]
        %v466 = vld [vmem:[#allocation5 + $0x21c] sm:$0xf]
        %v467 = vld [vmem:[#allocation5 + $0x220] sm:$0xf]
        %v468 = vld [vmem:[#allocation5 + $0x224] sm:$0xf]
        %v469 = vld [vmem:[#allocation5 + $0x228] sm:$0xf]
        %v470 = vld [vmem:[#allocation5 + $0x22c] sm:$0xf]
        %v471 = vld [vmem:[#allocation5 + $0x230] sm:$0xf]
        %v472 = vld [vmem:[#allocation5 + $0x234] sm:$0xf]
        %v473 = vld [vmem:[#allocation5 + $0x238] sm:$0xf]
        %v474 = vld [vmem:[#allocation5 + $0x23c] sm:$0xf]
        %v619 = vunpack.c.l.b16 %v331
        %v620 = vunpack.c.l.b16 %v332
        %v621 = vunpack.c.l.b16 %v333
        %v622 = vunpack.c.l.b16 %v334
        %v623 = vunpack.c.l.b16 %v335
        %v624 = vunpack.c.l.b16 %v336
        %v625 = vunpack.c.l.b16 %v337
        %v626 = vunpack.c.l.b16 %v338
        %v627 = vunpack.c.l.b16 %v339
        %v628 = vunpack.c.l.b16 %v340
        %v629 = vunpack.c.l.b16 %v341
        %v630 = vunpack.c.l.b16 %v342
        %v631 = vunpack.c.l.b16 %v343
        %v632 = vunpack.c.l.b16 %v344
        %v633 = vunpack.c.l.b16 %v345
        %v634 = vunpack.c.l.b16 %v346
        %v635 = vunpack.c.l.b16 %v347
        %v636 = vunpack.c.l.b16 %v348
        %v637 = vunpack.c.l.b16 %v349
        %v638 = vunpack.c.l.b16 %v350
        %v639 = vunpack.c.l.b16 %v351
        %v640 = vunpack.c.l.b16 %v352
        %v641 = vunpack.c.l.b16 %v353
        %v642 = vunpack.c.l.b16 %v354
        %v643 = vunpack.c.l.b16 %v355
        %v644 = vunpack.c.l.b16 %v356
        %v645 = vunpack.c.l.b16 %v357
        %v646 = vunpack.c.l.b16 %v358
        %v647 = vunpack.c.l.b16 %v359
        %v648 = vunpack.c.l.b16 %v360
        %v649 = vunpack.c.l.b16 %v361
        %v650 = vunpack.c.l.b16 %v362
        %v651 = vunpack.c.l.b16 %v363
        %v652 = vunpack.c.l.b16 %v364
        %v653 = vunpack.c.l.b16 %v365
        %v654 = vunpack.c.l.b16 %v366
        %v655 = vunpack.c.l.b16 %v367
        %v656 = vunpack.c.l.b16 %v368
        %v657 = vunpack.c.l.b16 %v369
        %v658 = vunpack.c.l.b16 %v370
        %v659 = vunpack.c.l.b16 %v371
        %v660 = vunpack.c.l.b16 %v372
        %v661 = vunpack.c.l.b16 %v373
        %v662 = vunpack.c.l.b16 %v374
        %v663 = vunpack.c.l.b16 %v375
        %v664 = vunpack.c.l.b16 %v376
        %v665 = vunpack.c.l.b16 %v377
        %v666 = vunpack.c.l.b16 %v378
        %v667 = vunpack.c.l.b16 %v379
        %v668 = vunpack.c.l.b16 %v380
        %v669 = vunpack.c.l.b16 %v381
        %v670 = vunpack.c.l.b16 %v382
        %v671 = vunpack.c.l.b16 %v383
        %v672 = vunpack.c.l.b16 %v384
        %v673 = vunpack.c.l.b16 %v385
        %v674 = vunpack.c.l.b16 %v386
        %v675 = vunpack.c.l.b16 %v387
        %v676 = vunpack.c.l.b16 %v388
        %v677 = vunpack.c.l.b16 %v389
        %v678 = vunpack.c.l.b16 %v390
        %v679 = vunpack.c.l.b16 %v391
        %v680 = vunpack.c.l.b16 %v392
        %v681 = vunpack.c.l.b16 %v393
        %v682 = vunpack.c.l.b16 %v394
        %v683 = vunpack.c.l.b16 %v395
        %v684 = vunpack.c.l.b16 %v396
        %v685 = vunpack.c.l.b16 %v397
        %v686 = vunpack.c.l.b16 %v398
        %v687 = vunpack.c.l.b16 %v399
        %v688 = vunpack.c.l.b16 %v400
        %v689 = vunpack.c.l.b16 %v401
        %v690 = vunpack.c.l.b16 %v402
        %v691 = vunpack.c.l.b16 %v403
        %v692 = vunpack.c.l.b16 %v404
        %v693 = vunpack.c.l.b16 %v405
        %v694 = vunpack.c.l.b16 %v406
        %v695 = vunpack.c.l.b16 %v407
        %v696 = vunpack.c.l.b16 %v408
        %v697 = vunpack.c.l.b16 %v409
        %v698 = vunpack.c.l.b16 %v410
        %v699 = vunpack.c.l.b16 %v411
        %v700 = vunpack.c.l.b16 %v412
        %v701 = vunpack.c.l.b16 %v413
        %v702 = vunpack.c.l.b16 %v414
        %v703 = vunpack.c.l.b16 %v415
        %v704 = vunpack.c.l.b16 %v416
        %v705 = vunpack.c.l.b16 %v417
        %v706 = vunpack.c.l.b16 %v418
        %v707 = vunpack.c.l.b16 %v419
        %v708 = vunpack.c.l.b16 %v420
        %v709 = vunpack.c.l.b16 %v421
        %v710 = vunpack.c.l.b16 %v422
        %v711 = vunpack.c.l.b16 %v423
        %v712 = vunpack.c.l.b16 %v424
        %v713 = vunpack.c.l.b16 %v425
        %v714 = vunpack.c.l.b16 %v426
        %v715 = vunpack.c.l.b16 %v427
        %v716 = vunpack.c.l.b16 %v428
        %v717 = vunpack.c.l.b16 %v429
        %v718 = vunpack.c.l.b16 %v430
        %v719 = vunpack.c.l.b16 %v431
        %v720 = vunpack.c.l.b16 %v432
        %v721 = vunpack.c.l.b16 %v433
        %v722 = vunpack.c.l.b16 %v434
        %v723 = vunpack.c.l.b16 %v435
        %v724 = vunpack.c.l.b16 %v436
        %v725 = vunpack.c.l.b16 %v437
        %v726 = vunpack.c.l.b16 %v438
        %v727 = vunpack.c.l.b16 %v439
        %v728 = vunpack.c.l.b16 %v440
        %v729 = vunpack.c.l.b16 %v441
        %v730 = vunpack.c.l.b16 %v442
        %v731 = vunpack.c.l.b16 %v443
        %v732 = vunpack.c.l.b16 %v444
        %v733 = vunpack.c.l.b16 %v445
        %v734 = vunpack.c.l.b16 %v446
        %v735 = vunpack.c.l.b16 %v447
        %v736 = vunpack.c.l.b16 %v448
        %v737 = vunpack.c.l.b16 %v449
        %v738 = vunpack.c.l.b16 %v450
        %v739 = vunpack.c.l.b16 %v451
        %v740 = vunpack.c.l.b16 %v452
        %v741 = vunpack.c.l.b16 %v453
        %v742 = vunpack.c.l.b16 %v454
        %v743 = vunpack.c.l.b16 %v455
        %v744 = vunpack.c.l.b16 %v456
        %v745 = vunpack.c.l.b16 %v457
        %v746 = vunpack.c.l.b16 %v458
        %v747 = vunpack.c.l.b16 %v459
        %v748 = vunpack.c.l.b16 %v460
        %v749 = vunpack.c.l.b16 %v461
        %v750 = vunpack.c.l.b16 %v462
        %v751 = vunpack.c.l.b16 %v463
        %v752 = vunpack.c.l.b16 %v464
        %v753 = vunpack.c.l.b16 %v465
        %v754 = vunpack.c.l.b16 %v466
        %v755 = vunpack.c.l.b16 %v467
        %v756 = vunpack.c.l.b16 %v468
        %v757 = vunpack.c.l.b16 %v469
        %v758 = vunpack.c.l.b16 %v470
        %v759 = vunpack.c.l.b16 %v471
        %v760 = vunpack.c.l.b16 %v472
        %v761 = vunpack.c.l.b16 %v473
        %v762 = vunpack.c.l.b16 %v474
        %v763 = vpack.c.b16 %v620, %v619
        %v764 = vpack.c.b16 %v622, %v621
        %v765 = vpack.c.b16 %v624, %v623
        %v766 = vpack.c.b16 %v626, %v625
        %v767 = vpack.c.b16 %v628, %v627
        %v768 = vpack.c.b16 %v630, %v629
        %v769 = vpack.c.b16 %v632, %v631
        %v770 = vpack.c.b16 %v634, %v633
        %v771 = vpack.c.b16 %v636, %v635
        %v772 = vpack.c.b16 %v638, %v637
        %v773 = vpack.c.b16 %v640, %v639
        %v774 = vpack.c.b16 %v642, %v641
        %v775 = vpack.c.b16 %v644, %v643
        %v776 = vpack.c.b16 %v646, %v645
        %v777 = vpack.c.b16 %v648, %v647
        %v778 = vpack.c.b16 %v650, %v649
        %v779 = vpack.c.b16 %v652, %v651
        %v780 = vpack.c.b16 %v654, %v653
        %v781 = vpack.c.b16 %v656, %v655
        %v782 = vpack.c.b16 %v658, %v657
        %v783 = vpack.c.b16 %v660, %v659
        %v784 = vpack.c.b16 %v662, %v661
        %v785 = vpack.c.b16 %v664, %v663
        %v786 = vpack.c.b16 %v666, %v665
        %v787 = vpack.c.b16 %v668, %v667
        %v788 = vpack.c.b16 %v670, %v669
        %v789 = vpack.c.b16 %v672, %v671
        %v790 = vpack.c.b16 %v674, %v673
        %v791 = vpack.c.b16 %v676, %v675
        %v792 = vpack.c.b16 %v678, %v677
        %v793 = vpack.c.b16 %v680, %v679
        %v794 = vpack.c.b16 %v682, %v681
        %v795 = vpack.c.b16 %v684, %v683
        %v796 = vpack.c.b16 %v686, %v685
        %v797 = vpack.c.b16 %v688, %v687
        %v798 = vpack.c.b16 %v690, %v689
        %v799 = vpack.c.b16 %v692, %v691
        %v800 = vpack.c.b16 %v694, %v693
        %v801 = vpack.c.b16 %v696, %v695
        %v802 = vpack.c.b16 %v698, %v697
        %v803 = vpack.c.b16 %v700, %v699
        %v804 = vpack.c.b16 %v702, %v701
        %v805 = vpack.c.b16 %v704, %v703
        %v806 = vpack.c.b16 %v706, %v705
        %v807 = vpack.c.b16 %v708, %v707
        %v808 = vpack.c.b16 %v710, %v709
        %v809 = vpack.c.b16 %v712, %v711
        %v810 = vpack.c.b16 %v714, %v713
        %v811 = vpack.c.b16 %v716, %v715
        %v812 = vpack.c.b16 %v718, %v717
        %v813 = vpack.c.b16 %v720, %v719
        %v814 = vpack.c.b16 %v722, %v721
        %v815 = vpack.c.b16 %v724, %v723
        %v816 = vpack.c.b16 %v726, %v725
        %v817 = vpack.c.b16 %v728, %v727
        %v818 = vpack.c.b16 %v730, %v729
        %v819 = vpack.c.b16 %v732, %v731
        %v820 = vpack.c.b16 %v734, %v733
        %v821 = vpack.c.b16 %v736, %v735
        %v822 = vpack.c.b16 %v738, %v737
        %v823 = vpack.c.b16 %v740, %v739
        %v824 = vpack.c.b16 %v742, %v741
        %v825 = vpack.c.b16 %v744, %v743
        %v826 = vpack.c.b16 %v746, %v745
        %v827 = vpack.c.b16 %v748, %v747
        %v828 = vpack.c.b16 %v750, %v749
        %v829 = vpack.c.b16 %v752, %v751
        %v830 = vpack.c.b16 %v754, %v753
        %v831 = vpack.c.b16 %v756, %v755
        %v832 = vpack.c.b16 %v758, %v757
        %v833 = vpack.c.b16 %v760, %v759
        %v834 = vpack.c.b16 %v762, %v761
        %907 = vmatprep.subr.bf16.mxu0 0
        %908 = vmatpush1.bf16.msra.mxu0 %v770
        %909 = vmatprep.subr.bf16.mxu0 0
        %910 = vmatpush1.bf16.msra.mxu0 %v769
        %911 = vmatprep.subr.bf16.mxu0 0
        %912 = vmatpush1.bf16.msra.mxu0 %v768
        %913 = vmatprep.subr.bf16.mxu0 0
        %914 = vmatpush1.bf16.msra.mxu0 %v767
        %915 = vmatprep.subr.bf16.mxu0 0
        %916 = vmatpush1.bf16.msra.mxu0 %v766
        %917 = vmatprep.subr.bf16.mxu0 0
        %918 = vmatpush1.bf16.msra.mxu0 %v765
        %919 = vmatprep.subr.bf16.mxu0 0
        %920 = vmatpush1.bf16.msra.mxu0 %v764
        %921 = vmatprep.subr.bf16.mxu0 0
        %922 = vmatpush1.bf16.msra.mxu0 %v763
        %923 = vmatprep.subr.bf16.mxu0 0
        %924 = vmatpush2.bf16.msra.mxu0 %v778
        %925 = vmatprep.subr.bf16.mxu0 0
        %926 = vmatpush2.bf16.msra.mxu0 %v777
        %927 = vmatprep.subr.bf16.mxu0 0
        %928 = vmatpush2.bf16.msra.mxu0 %v776
        %929 = vmatprep.subr.bf16.mxu0 0
        %930 = vmatpush2.bf16.msra.mxu0 %v775
        %931 = vmatprep.subr.bf16.mxu0 0
        %932 = vmatpush2.bf16.msra.mxu0 %v774
        %933 = vmatprep.subr.bf16.mxu0 0
        %934 = vmatpush2.bf16.msra.mxu0 %v773
        %935 = vmatprep.subr.bf16.mxu0 0
        %936 = vmatpush2.bf16.msra.mxu0 %v772
        %937 = vmatprep.subr.bf16.mxu0 0
        %938 = vmatpush2.bf16.msra.mxu0 %v771
        %939 = vmatprep.mubr.bf16.mxu0 %v239
        %940 = vmatmul.mubr.bf16.gmra.mxu0 %v226
        %v941 = vpop.f32.mrf.mxu0
        %v942 = vadd.f32 0.0, %v941
        %v943 = vpop.f32.mrf.mxu0
        %v944 = vpop.f32.mrf.mxu0
        %v945 = vadd.f32 0.0, %v944
        %v946 = vpop.f32.mrf.mxu0
        %947 = vmatprep.mubr.bf16.mxu0 %v240
        %948 = vmatmul.mubr.bf16.gmra.mxu0 %v227
        %v949 = vpop.f32.mrf.mxu0
        %v950 = vadd.f32 0.0, %v949
        %v951 = vpop.f32.mrf.mxu0
        %v952 = vpop.f32.mrf.mxu0
        %v953 = vadd.f32 0.0, %v952
        %v954 = vpop.f32.mrf.mxu0
        %955 = vmatprep.mubr.bf16.mxu0 %v241
        %956 = vmatmul.mubr.bf16.gmra.mxu0 %v228
        %v957 = vpop.f32.mrf.mxu0
        %v958 = vadd.f32 0.0, %v957
        %v959 = vpop.f32.mrf.mxu0
        %v960 = vpop.f32.mrf.mxu0
        %v961 = vadd.f32 0.0, %v960
        %v962 = vpop.f32.mrf.mxu0
        %963 = vmatprep.mubr.bf16.mxu0 %v242
        %964 = vmatmul.mubr.bf16.gmra.mxu0 %v229
        %v965 = vpop.f32.mrf.mxu0
        %v966 = vadd.f32 0.0, %v965
        %v967 = vpop.f32.mrf.mxu0
        %v968 = vpop.f32.mrf.mxu0
        %v969 = vadd.f32 0.0, %v968
        %v970 = vpop.f32.mrf.mxu0
        %971 = vdwg.mxu0
        %972 = vmatprep.subr.bf16.mxu0 0
        %973 = vmatpush1.bf16.msra.mxu0 %v786
        %974 = vmatprep.subr.bf16.mxu0 0
        %975 = vmatpush1.bf16.msra.mxu0 %v785
        %976 = vmatprep.subr.bf16.mxu0 0
        %977 = vmatpush1.bf16.msra.mxu0 %v784
        %978 = vmatprep.subr.bf16.mxu0 0
        %979 = vmatpush1.bf16.msra.mxu0 %v783
        %980 = vmatprep.subr.bf16.mxu0 0
        %981 = vmatpush1.bf16.msra.mxu0 %v782
        %982 = vmatprep.subr.bf16.mxu0 0
        %983 = vmatpush1.bf16.msra.mxu0 %v781
        %984 = vmatprep.subr.bf16.mxu0 0
        %985 = vmatpush1.bf16.msra.mxu0 %v780
        %986 = vmatprep.subr.bf16.mxu0 0
        %987 = vmatpush1.bf16.msra.mxu0 %v779
        %988 = vmatprep.subr.bf16.mxu0 0
        %989 = vmatpush2.bf16.msra.mxu0 %v794
        %990 = vmatprep.subr.bf16.mxu0 0
        %991 = vmatpush2.bf16.msra.mxu0 %v793
        %992 = vmatprep.subr.bf16.mxu0 0
        %993 = vmatpush2.bf16.msra.mxu0 %v792
        %994 = vmatprep.subr.bf16.mxu0 0
        %995 = vmatpush2.bf16.msra.mxu0 %v791
        %996 = vmatprep.subr.bf16.mxu0 0
        %997 = vmatpush2.bf16.msra.mxu0 %v790
        %998 = vmatprep.subr.bf16.mxu0 0
        %999 = vmatpush2.bf16.msra.mxu0 %v789
        %1000 = vmatprep.subr.bf16.mxu0 0
        %1001 = vmatpush2.bf16.msra.mxu0 %v788
        %1002 = vmatprep.subr.bf16.mxu0 0
        %1003 = vmatpush2.bf16.msra.mxu0 %v787
        %1004 = vmatprep.mubr.bf16.mxu0 %v264
        %1005 = vmatmul.mubr.bf16.gmra.mxu0 %v251
        %v1006 = vpop.f32.mrf.mxu0
        %v1007 = vadd.f32 %v942, %v1006
        %v1008 = vpop.f32.mrf.mxu0
        %v1009 = vpop.f32.mrf.mxu0
        %v1010 = vadd.f32 %v945, %v1009
        %v1011 = vpop.f32.mrf.mxu0
        %1012 = vmatprep.mubr.bf16.mxu0 %v265
        %1013 = vmatmul.mubr.bf16.gmra.mxu0 %v252
        %v1014 = vpop.f32.mrf.mxu0
        %v1015 = vadd.f32 %v950, %v1014
        %v1016 = vpop.f32.mrf.mxu0
        %v1017 = vpop.f32.mrf.mxu0
        %v1018 = vadd.f32 %v953, %v1017
        %v1019 = vpop.f32.mrf.mxu0
        %1020 = vmatprep.mubr.bf16.mxu0 %v266
        %1021 = vmatmul.mubr.bf16.gmra.mxu0 %v253
        %v1022 = vpop.f32.mrf.mxu0
        %v1023 = vadd.f32 %v958, %v1022
        %v1024 = vpop.f32.mrf.mxu0
        %v1025 = vpop.f32.mrf.mxu0
        %v1026 = vadd.f32 %v961, %v1025
        %v1027 = vpop.f32.mrf.mxu0
        %1028 = vmatprep.mubr.bf16.mxu0 %v267
        %1029 = vmatmul.mubr.bf16.gmra.mxu0 %v254
        %v1030 = vpop.f32.mrf.mxu0
        %v1031 = vadd.f32 %v966, %v1030
        %v1032 = vpop.f32.mrf.mxu0
        %v1033 = vpop.f32.mrf.mxu0
        %v1034 = vadd.f32 %v969, %v1033
        %v1035 = vpop.f32.mrf.mxu0
        %1036 = vdwg.mxu0
        %1037 = vmatprep.subr.bf16.mxu0 0
        %1038 = vmatpush1.bf16.msra.mxu0 %v802
        %1039 = vmatprep.subr.bf16.mxu0 0
        %1040 = vmatpush1.bf16.msra.mxu0 %v801
        %1041 = vmatprep.subr.bf16.mxu0 0
        %1042 = vmatpush1.bf16.msra.mxu0 %v800
        %1043 = vmatprep.subr.bf16.mxu0 0
        %1044 = vmatpush1.bf16.msra.mxu0 %v799
        %1045 = vmatprep.subr.bf16.mxu0 0
        %1046 = vmatpush1.bf16.msra.mxu0 %v798
        %1047 = vmatprep.subr.bf16.mxu0 0
        %1048 = vmatpush1.bf16.msra.mxu0 %v797
        %1049 = vmatprep.subr.bf16.mxu0 0
        %1050 = vmatpush1.bf16.msra.mxu0 %v796
        %1051 = vmatprep.subr.bf16.mxu0 0
        %1052 = vmatpush1.bf16.msra.mxu0 %v795
        %1053 = vmatprep.subr.bf16.mxu0 0
        %1054 = vmatpush2.bf16.msra.mxu0 %v810
        %1055 = vmatprep.subr.bf16.mxu0 0
        %1056 = vmatpush2.bf16.msra.mxu0 %v809
        %1057 = vmatprep.subr.bf16.mxu0 0
        %1058 = vmatpush2.bf16.msra.mxu0 %v808
        %1059 = vmatprep.subr.bf16.mxu0 0
        %1060 = vmatpush2.bf16.msra.mxu0 %v807
        %1061 = vmatprep.subr.bf16.mxu0 0
        %1062 = vmatpush2.bf16.msra.mxu0 %v806
        %1063 = vmatprep.subr.bf16.mxu0 0
        %1064 = vmatpush2.bf16.msra.mxu0 %v805
        %1065 = vmatprep.subr.bf16.mxu0 0
        %1066 = vmatpush2.bf16.msra.mxu0 %v804
        %1067 = vmatprep.subr.bf16.mxu0 0
        %1068 = vmatpush2.bf16.msra.mxu0 %v803
        %1069 = vmatprep.mubr.bf16.mxu0 %v289
        %1070 = vmatmul.mubr.bf16.gmra.mxu0 %v277
        %v1071 = vpop.f32.mrf.mxu0
        %v1072 = vadd.f32 %v1007, %v1071
        %v1073 = vpop.f32.mrf.mxu0
        %v1074 = vpop.f32.mrf.mxu0
        %v1075 = vadd.f32 %v1010, %v1074
        %v1076 = vpop.f32.mrf.mxu0
        %1077 = vmatprep.mubr.bf16.mxu0 %v290
        %1078 = vmatmul.mubr.bf16.gmra.mxu0 %v278
        %v1079 = vpop.f32.mrf.mxu0
        %v1080 = vadd.f32 %v1015, %v1079
        %v1081 = vpop.f32.mrf.mxu0
        %v1082 = vpop.f32.mrf.mxu0
        %v1083 = vadd.f32 %v1018, %v1082
        %v1084 = vpop.f32.mrf.mxu0
        %1085 = vmatprep.mubr.bf16.mxu0 %v291
        %1086 = vmatmul.mubr.bf16.gmra.mxu0 %v279
        %v1087 = vpop.f32.mrf.mxu0
        %v1088 = vadd.f32 %v1023, %v1087
        %v1089 = vpop.f32.mrf.mxu0
        %v1090 = vpop.f32.mrf.mxu0
        %v1091 = vadd.f32 %v1026, %v1090
        %v1092 = vpop.f32.mrf.mxu0
        %1093 = vmatprep.mubr.bf16.mxu0 %v292
        %1094 = vmatmul.mubr.bf16.gmra.mxu0 %v280
        %v1095 = vpop.f32.mrf.mxu0
        %v1096 = vadd.f32 %v1031, %v1095
        %v1097 = vpop.f32.mrf.mxu0
        %v1098 = vpop.f32.mrf.mxu0
        %v1099 = vadd.f32 %v1034, %v1098
        %v1100 = vpop.f32.mrf.mxu0
        %1101 = vdwg.mxu0
        %1102 = vmatprep.subr.bf16.mxu0 0
        %1103 = vmatpush1.bf16.msra.mxu0 %v818
        %1104 = vmatprep.subr.bf16.mxu0 0
        %1105 = vmatpush1.bf16.msra.mxu0 %v817
        %1106 = vmatprep.subr.bf16.mxu0 0
        %1107 = vmatpush1.bf16.msra.mxu0 %v816
        %1108 = vmatprep.subr.bf16.mxu0 0
        %1109 = vmatpush1.bf16.msra.mxu0 %v815
        %1110 = vmatprep.subr.bf16.mxu0 0
        %1111 = vmatpush1.bf16.msra.mxu0 %v814
        %1112 = vmatprep.subr.bf16.mxu0 0
        %1113 = vmatpush1.bf16.msra.mxu0 %v813
        %1114 = vmatprep.subr.bf16.mxu0 0
        %1115 = vmatpush1.bf16.msra.mxu0 %v812
        %1116 = vmatprep.subr.bf16.mxu0 0
        %1117 = vmatpush1.bf16.msra.mxu0 %v811
        %1118 = vmatprep.subr.bf16.mxu0 0
        %1119 = vmatpush2.bf16.msra.mxu0 %v826
        %1120 = vmatprep.subr.bf16.mxu0 0
        %1121 = vmatpush2.bf16.msra.mxu0 %v825
        %1122 = vmatprep.subr.bf16.mxu0 0
        %1123 = vmatpush2.bf16.msra.mxu0 %v824
        %1124 = vmatprep.subr.bf16.mxu0 0
        %1125 = vmatpush2.bf16.msra.mxu0 %v823
        %1126 = vmatprep.subr.bf16.mxu0 0
        %1127 = vmatpush2.bf16.msra.mxu0 %v822
        %1128 = vmatprep.subr.bf16.mxu0 0
        %1129 = vmatpush2.bf16.msra.mxu0 %v821
        %1130 = vmatprep.subr.bf16.mxu0 0
        %1131 = vmatpush2.bf16.msra.mxu0 %v820
        %1132 = vmatprep.subr.bf16.mxu0 0
        %1133 = vmatpush2.bf16.msra.mxu0 %v819
        %1134 = vmatprep.mubr.bf16.mxu0 %v315
        %1135 = vmatmul.mubr.bf16.gmra.mxu0 %v302
        %v1136 = vpop.f32.mrf.mxu0
        %v1137 = vadd.f32 %v1072, %v1136
        %v1138 = vpop.f32.mrf.mxu0
        %v1139 = vpop.f32.mrf.mxu0
        %v1140 = vadd.f32 %v1075, %v1139
        %v1141 = vpop.f32.mrf.mxu0
        %1142 = vmatprep.mubr.bf16.mxu0 %v316
        %1143 = vmatmul.mubr.bf16.gmra.mxu0 %v303
        %v1144 = vpop.f32.mrf.mxu0
        %v1145 = vadd.f32 %v1080, %v1144
        %v1146 = vpop.f32.mrf.mxu0
        %v1147 = vpop.f32.mrf.mxu0
        %v1148 = vadd.f32 %v1083, %v1147
        %v1149 = vpop.f32.mrf.mxu0
        %1150 = vmatprep.mubr.bf16.mxu0 %v317
        %1151 = vmatmul.mubr.bf16.gmra.mxu0 %v304
        %v1152 = vpop.f32.mrf.mxu0
        %v1153 = vadd.f32 %v1088, %v1152
        %v1154 = vpop.f32.mrf.mxu0
        %v1155 = vpop.f32.mrf.mxu0
        %v1156 = vadd.f32 %v1091, %v1155
        %v1157 = vpop.f32.mrf.mxu0
        %1158 = vmatprep.mubr.bf16.mxu0 %v318
        %1159 = vmatmul.mubr.bf16.gmra.mxu0 %v305
        %v1160 = vpop.f32.mrf.mxu0
        %v1161 = vadd.f32 %v1096, %v1160
        %v1162 = vpop.f32.mrf.mxu0
        %v1163 = vpop.f32.mrf.mxu0
        %v1164 = vadd.f32 %v1099, %v1163
        %v1165 = vpop.f32.mrf.mxu0
        %1166 = vdwg.mxu0
        %1167 = vmatprep.subr.bf16.mxu0 0
        %1168 = vmatpush1.bf16.msra.mxu0 %v834
        %1169 = vmatprep.subr.bf16.mxu0 0
        %1170 = vmatpush1.bf16.msra.mxu0 %v833
        %1171 = vmatprep.subr.bf16.mxu0 0
        %1172 = vmatpush1.bf16.msra.mxu0 %v832
        %1173 = vmatprep.subr.bf16.mxu0 0
        %1174 = vmatpush1.bf16.msra.mxu0 %v831
        %1175 = vmatprep.subr.bf16.mxu0 0
        %1176 = vmatpush1.bf16.msra.mxu0 %v830
        %1177 = vmatprep.subr.bf16.mxu0 0
        %1178 = vmatpush1.bf16.msra.mxu0 %v829
        %1179 = vmatprep.subr.bf16.mxu0 0
        %1180 = vmatpush1.bf16.msra.mxu0 %v828
        %1181 = vmatprep.subr.bf16.mxu0 0
        %1182 = vmatpush1.bf16.msra.mxu0 %v827
        %1183 = vmatprep.subr.bf16.mxu0 0
        %1184 = vmatpush2.bf16.msra.mxu0 0
        %1185 = vmatprep.subr.bf16.mxu0 0
        %1186 = vmatpush2.bf16.msra.mxu0 0
        %1187 = vmatprep.subr.bf16.mxu0 0
        %1188 = vmatpush2.bf16.msra.mxu0 0
        %1189 = vmatprep.subr.bf16.mxu0 0
        %1190 = vmatpush2.bf16.msra.mxu0 0
        %1191 = vmatprep.subr.bf16.mxu0 0
        %1192 = vmatpush2.bf16.msra.mxu0 0
        %1193 = vmatprep.subr.bf16.mxu0 0
        %1194 = vmatpush2.bf16.msra.mxu0 0
        %1195 = vmatprep.subr.bf16.mxu0 0
        %1196 = vmatpush2.bf16.msra.mxu0 0
        %1197 = vmatprep.subr.bf16.mxu0 0
        %1198 = vmatpush2.bf16.msra.mxu0 0
        %1199 = vmatprep.mubr.bf16.mxu0 0
        %1200 = vmatmul.mubr.bf16.gmra.mxu0 %v327
        %v1201 = vpop.f32.mrf.mxu0
        %v1202 = vadd.f32 %v1137, %v1201
        %v1203 = vpop.f32.mrf.mxu0
        %v1204 = vpop.f32.mrf.mxu0
        %v1205 = vadd.f32 %v1140, %v1204
        %v1206 = vpop.f32.mrf.mxu0
        %1207 = vmatprep.mubr.bf16.mxu0 0
        %1208 = vmatmul.mubr.bf16.gmra.mxu0 %v328
        %v1209 = vpop.f32.mrf.mxu0
        %v1210 = vadd.f32 %v1145, %v1209
        %v1211 = vpop.f32.mrf.mxu0
        %v1212 = vpop.f32.mrf.mxu0
        %v1213 = vadd.f32 %v1148, %v1212
        %v1214 = vpop.f32.mrf.mxu0
        %1215 = vmatprep.mubr.bf16.mxu0 0
        %1216 = vmatmul.mubr.bf16.gmra.mxu0 %v329
        %v1217 = vpop.f32.mrf.mxu0
        %v1218 = vadd.f32 %v1153, %v1217
        %v1219 = vpop.f32.mrf.mxu0
        %v1220 = vpop.f32.mrf.mxu0
        %v1221 = vadd.f32 %v1156, %v1220
        %v1222 = vpop.f32.mrf.mxu0
        %1223 = vmatprep.mubr.bf16.mxu0 0
        %1224 = vmatmul.mubr.bf16.gmra.mxu0 %v330
        %v1225 = vpop.f32.mrf.mxu0
        %v1226 = vadd.f32 %v1161, %v1225
        %v1227 = vpop.f32.mrf.mxu0
        %v1228 = vpop.f32.mrf.mxu0
        %v1229 = vadd.f32 %v1164, %v1228
        %v1230 = vpop.f32.mrf.mxu0
        %1231 = vdwg.mxu0
        %1232 = vst [vmem:[%s208] sm:$0xff] %v1202
        %1233 = vst [vmem:[%s208 + $0x8] sm:$0xff] %v1205
        %1234 = vst [vmem:[%s208 + $0x10] sm:$0xff] %v1210
        %1235 = vst [vmem:[%s208 + $0x18] sm:$0xff] %v1213
        %1236 = vst [vmem:[%s208 + $0x20] sm:$0xff] %v1218
        %1237 = vst [vmem:[%s208 + $0x28] sm:$0xff] %v1221
        %1238 = vst [vmem:[%s208 + $0x30] sm:$0xff] %v1226
        %1239 = vst [vmem:[%s208 + $0x38] sm:$0xff] %v1229
        %v1240 = vadd.f32 %v1202, %v1205
        %v1241 = vadd.f32 %v1240, %v1210
        %v1242 = vadd.f32 %v1241, %v1213
        %v1243 = vadd.f32 %v1242, %v1218
        %v1244 = vadd.f32 %v1243, %v1221
        %v1245 = vadd.f32 %v1244, %v1226
        %v1246 = vadd.f32 %v1245, %v1229
        %v1247 = vrot.slane %v1246, 4
        %v1248 = vadd.f32 %v1246, %v1247
        %v1249 = vrot.slane %v1248, 2
        %v1250 = vadd.f32 %v1248, %v1249
        %v1251 = vrot.slane %v1250, 1
        %v1252 = vadd.f32 %v1250, %v1251
        %v1253 = vmul.f32 %v1202, %v1202
        %v1254 = vmul.f32 %v1205, %v1205
        %v1255 = vmul.f32 %v1210, %v1210
        %v1256 = vmul.f32 %v1213, %v1213
        %v1257 = vmul.f32 %v1218, %v1218
        %v1258 = vmul.f32 %v1221, %v1221
        %v1259 = vmul.f32 %v1226, %v1226
        %v1260 = vmul.f32 %v1229, %v1229
        %v1261 = vadd.f32 %v1253, %v1254
        %v1262 = vadd.f32 %v1261, %v1255
        %v1263 = vadd.f32 %v1262, %v1256
        %v1264 = vadd.f32 %v1263, %v1257
        %v1265 = vadd.f32 %v1264, %v1258
        %v1266 = vadd.f32 %v1265, %v1259
        %v1267 = vadd.f32 %v1266, %v1260
        %v1268 = vrot.slane %v1267, 4
        %v1269 = vadd.f32 %v1267, %v1268
        %v1270 = vrot.slane %v1269, 2
        %v1271 = vadd.f32 %v1269, %v1270
        %v1272 = vrot.slane %v1271, 1
        %v1273 = vadd.f32 %v1271, %v1272
        %vm1274 = vcmask 1040384
        %v1275 = vsel %vm1274, %v1252, %v1273
        %1276 = vst [vmem:[%s215] sm:$0x3] %v1275
        %s1277 = sand.u32 %s80, 1
        %s1278 = scalar_lea.sflag [#allocation4], %s1277
        %s1279 = sand.u32 %s80, 1
        %s1280 = smul.addr %s1279, 64
        %s1281 = scalar_lea.vmem [#allocation7], %s1280
        %s1282 = sand.u32 %s106, 1
        %s1283 = scalar_lea.sflag [#allocation9], %s1282
        %s1284 = sand.u32 %s106, 1
        %s1285 = smul.addr %s1284, 2
        %s1286 = scalar_lea.vmem [#allocation8], %s1285
        // Predicated region
        $region37: #{tpu_custom_call.1} parent=27 // pred_check
          %p1287 = pneg %p90
        $region38: #{tpu_custom_call.1} parent=27 // pred_check_branch
          %1289 = sbr.rel (%p1287) target = $region40
        $region39: #{tpu_custom_call.1} parent=27 // pred_region
          %s1291 = ssub.s32 1024, 1024
          %1292 = vsyncadd %s1278, %s1291
          %s1293 = smul.addr %s25, 8
          %s1294 = smul.addr %s1293, 128
          %s1295 = scalar_lea.hbm %s2, %s1294
          %s1296 = sshll.u32 %s1281, 4
          %s1297 = int_to_ptr.vmem [resolvable:$true] %s1296
          %1302 = dma.vmem_to_hbm [thread:$0]  %s1297, 1024, %s1295, %s1278, 128, 128, 8
        $region40: #{tpu_custom_call.1} parent=27 // pred_fallthru
          _
        // Predicated region
        $region41: #{tpu_custom_call.1} parent=27 // pred_check
          %p1303 = pneg %p116
        $region42: #{tpu_custom_call.1} parent=27 // pred_check_branch
          %1305 = sbr.rel (%p1303) target = $region44
        $region43: #{tpu_custom_call.1} parent=27 // pred_region
          %s1307 = ssub.s32 32, 32
          %1308 = vsyncadd %s1283, %s1307
          %s1309 = smul.addr %s25, 32
          %s1310 = scalar_lea.hbm %s3, %s1309
          %s1312 = sshll.u32 %s1286, 4
          %s1313 = int_to_ptr.vmem [resolvable:$true] %s1312
          %1315 = dma.vmem_to_hbm [thread:$0]  %s1313, 32, %s1310, %s1283
        $region44: #{tpu_custom_call.1} parent=27 // pred_fallthru
          _
      $region28: #{tpu_custom_call.1} parent=5 // pred_fallthru
        _
      %p1316 = scmp.le.s32.totalorder 2, %s20
      // Predicated region
      $region45: #{tpu_custom_call.1} parent=5 // pred_check
        %p1317 = pneg %p1316
      $region46: #{tpu_custom_call.1} parent=5 // pred_check_branch
        %1319 = sbr.rel (%p1317) target = $region48
      $region47: #{tpu_custom_call.1} parent=5 // pred_region
        %s1320 = ssub.s32 %s20, 2
        // Predicated region
        $region49: #{tpu_custom_call.1} parent=47 // pred_check
          %p1321 = pneg %p96
        $region50: #{tpu_custom_call.1} parent=47 // pred_check_branch
          %1323 = sbr.rel (%p1321) target = $region52
        $region51: #{tpu_custom_call.1} parent=47 // pred_region
          %s1324 = sand.u32 %s81, 1
          %s1325 = scalar_lea.sflag [#allocation4], %s1324
          %s1326 = sand.u32 %s81, 1
          %s1327 = smul.addr %s1326, 64
          %s1328 = scalar_lea.vmem [#allocation7], %s1327
          %1329 = dma.done %s1325, 1024
        $region52: #{tpu_custom_call.1} parent=47 // pred_fallthru
          _
        // Predicated region
        $region53: #{tpu_custom_call.1} parent=47 // pred_check
          %p1330 = pneg %p122
        $region54: #{tpu_custom_call.1} parent=47 // pred_check_branch
          %1332 = sbr.rel (%p1330) target = $region56
        $region55: #{tpu_custom_call.1} parent=47 // pred_region
          %s1333 = sand.u32 %s107, 1
          %s1334 = scalar_lea.sflag [#allocation9], %s1333
          %s1335 = sand.u32 %s107, 1
          %s1336 = smul.addr %s1335, 2
          %s1337 = scalar_lea.vmem [#allocation8], %s1336
          %1338 = dma.done %s1334, 32
        $region56: #{tpu_custom_call.1} parent=47 // pred_fallthru
          _
      $region48: #{tpu_custom_call.1} parent=5 // pred_fallthru
        _
    $region6: #{tpu_custom_call.1} parent=1 // loop_footer
      %s24 = sadd.s32 1, %s20
    $region7: #{tpu_custom_call.1} parent=1 // loop_footer_branch
      %19 = sbr.rel target = $region3
    $region8: #{tpu_custom_call.1} parent=1 // loop_exit
      _
    %1339 = vsyncpa [#allocation3], 1
    %s1340 = scalar_lea.sflag [#allocation3], 1
    %1341 = vsyncpa %s1340, 1
    %1342 = vsyncpa [#allocation6], 1
    %1343 = vsyncpa [#allocation4], 1
    %s1344 = scalar_lea.sflag [#allocation4], 1
    %1345 = vsyncpa %s1344, 1
    %1346 = vsyncpa [#allocation9], 1
    %s1347 = scalar_lea.sflag [#allocation9], 1
    %1348 = vsyncpa %s1347, 1

</llo_original>
